<compile_context>
chip_gen: v5e
topology: v5e:2x2
jax: 0.10.0
libtpu: 0.0.40
codegen_flags: <defaults>
</compile_context>

<pallas_src>
import functools

import jax
import jax.numpy as jnp
from jax.experimental import pallas as pl
from jax.experimental.pallas import tpu as pltpu


# ----------------------------- Pallas kernel ------------------------------ #
def _flowsteps_kernel(x_ref, u_ref,
                      an_b_ref, an_s_ref, inv_w_ref,
                      w1t_ref, b1t_ref, w2t_ref, b2t_ref,
                      z_ref, ld_ref):
    """Runs all S flow steps on one tile of TT tokens (channels on sublanes, tokens on lanes).

    x_ref   : (C, TT)        image-feature tokens
    u_ref   : (Ccond, TT)    conditioning tokens (cond_fea); may be bf16 streamed
    an_b    : (S, C, 1)      actnorm bias (pre-transposed)
    an_s    : (S, C, 1)      exp(actnorm log-scale) (pre-exponentiated in wrapper)
    inv_w   : (S, C, C)      invertible 1x1 conv weight, applied as inv_w @ z
    w1t     : (S*Hd, Ccond)  coupling layer-1 weights, all steps concatenated + transposed
    b1t     : (S*Hd, 1)
    w2t     : (S, 2C, Hd)    coupling layer-2 weights, transposed
    b2t     : (S, 2C, 1)
    z_ref   : (C, TT)        output tokens
    ld_ref  : (1, TT)        per-token coupling log-det (lane-dense row)
    """
    C = z_ref.shape[0]
    S = inv_w_ref.shape[0]
    Hd = w2t_ref.shape[-1]

    # ---- conditional coupling network: depends only on u -> hoisted out of the z chain.
    u = u_ref[...].astype(jnp.float32)
    h = jnp.dot(w1t_ref[...], u, preferred_element_type=jnp.float32) + b1t_ref[...]
    h = jnp.maximum(h, 0.0)

    shifts, scales, log_scales = [], [], []
    for s in range(S):                                   # S is small & static -> unrolled
        st = (jnp.dot(w2t_ref[s], h[s * Hd:(s + 1) * Hd, :],
                      preferred_element_type=jnp.float32) + b2t_ref[s])
        a = st[C:, :] + 2.0
        # log(sigmoid(a)) = -softplus(-a), computed stably with exp/log only.
        log_sc = -(jnp.maximum(-a, 0.0) + jnp.log(1.0 + jnp.exp(-jnp.abs(a))))
        shifts.append(st[:C, :])
        log_scales.append(log_sc)
        scales.append(jnp.exp(log_sc))

    # ---- z chain: actnorm -> invertible 1x1 conv -> conditional affine coupling.
    z = x_ref[...].astype(jnp.float32)
    for s in range(S):
        z = (z + an_b_ref[s]) * an_s_ref[s]                                   # ActNorm
        z = jnp.dot(inv_w_ref[s], z, preferred_element_type=jnp.float32)      # inv 1x1 conv
        z = (z + shifts[s]) * scales[s]                                       # coupling

    total_log_scale = log_scales[0]
    for s in range(1, S):
        total_log_scale = total_log_scale + log_scales[s]

    z_ref[...] = z.astype(z_ref.dtype)
    ld_ref[...] = jnp.sum(total_log_scale, axis=0, keepdims=True)


# ------------------------------- wrapper ----------------------------------- #
def flow1dnet_encode(gt, cond_fea, params, logdet0=0.0, *,
                     token_tile=1024, cond_dtype=jnp.float32):
    """Flow1dNet.forward(gt=..., cond_fea=..., reverse=False) -> (z, logdet).

    gt       : (N, C, H, W)      float32, NCHW (PyTorch convention)
    cond_fea : (N, Ccond, H, W)  float32, NCHW
    cond_dtype: set to jnp.bfloat16 on v6e/v7x to halve the dominant HBM read stream
                (re-validate tolerances); default f32 keeps reference accuracy.
    returns  : z with the same NCHW shape as gt, logdet of shape (N,)
    """
    an_b, an_logs, inv_w, w1, b1, w2, b2 = params
    N, C, H, W = gt.shape
    Ccond = cond_fea.shape[1]
    S = an_b.shape[0]
    Hd = w1.shape[-1]

    # ---- channels-first / token-last layout: (C, T) with token order (n, h, w)
    T = N * H * W
    x_t = jnp.transpose(gt, (1, 0, 2, 3)).reshape(C, T)
    u_t = jnp.transpose(cond_fea, (1, 0, 2, 3)).reshape(Ccond, T).astype(cond_dtype)

    # ---- pick a lane-dense token tile and pad the tail (no divisibility assert)
    TT = int(min(token_tile, T))
    TT = max(128, (TT // 128) * 128)
    num_tiles = -(-T // TT)
    T_pad = num_tiles * TT
    if T_pad != T:
        x_t = jnp.pad(x_t, ((0, 0), (0, T_pad - T)))
        u_t = jnp.pad(u_t, ((0, 0), (0, T_pad - T)))

    # ---- pre-transform parameters once in the wrapper (nothing redundant per grid step)
    an_b_t = jnp.transpose(an_b, (0, 2, 1))               # (S, C, 1)
    an_s_t = jnp.exp(jnp.transpose(an_logs, (0, 2, 1)))   # (S, C, 1)  pre-exponentiated
    w1t = jnp.transpose(w1, (0, 2, 1)).reshape(S * Hd, Ccond)
    b1t = jnp.transpose(b1, (0, 2, 1)).reshape(S * Hd, 1)
    w2t = jnp.transpose(w2, (0, 2, 1))                    # (S, 2C, Hd)
    b2t = jnp.transpose(b2, (0, 2, 1))                    # (S, 2C, 1)

    grid_spec = pltpu.PrefetchScalarGridSpec(
        num_scalar_prefetch=0,
        grid=(num_tiles,),
        in_specs=[
            pl.BlockSpec((C, TT), lambda i: (0, i)),
            pl.BlockSpec((Ccond, TT), lambda i: (0, i)),
            pl.BlockSpec((S, C, 1), lambda i: (0, 0, 0)),
            pl.BlockSpec((S, C, 1), lambda i: (0, 0, 0)),
            pl.BlockSpec((S, C, C), lambda i: (0, 0, 0)),
            pl.BlockSpec((S * Hd, Ccond), lambda i: (0, 0)),
            pl.BlockSpec((S * Hd, 1), lambda i: (0, 0)),
            pl.BlockSpec((S, 2 * C, Hd), lambda i: (0, 0, 0)),
            pl.BlockSpec((S, 2 * C, 1), lambda i: (0, 0, 0)),
        ],
        out_specs=[
            pl.BlockSpec((C, TT), lambda i: (0, i)),
            pl.BlockSpec((1, TT), lambda i: (0, i)),
        ],
    )

    z_t, ld_row = pl.pallas_call(
        _flowsteps_kernel,
        out_shape=(jax.ShapeDtypeStruct((C, T_pad), jnp.float32),
                   jax.ShapeDtypeStruct((1, T_pad), jnp.float32)),
        grid_spec=grid_spec,
        compiler_params=pltpu.CompilerParams(
            dimension_semantics=("parallel",)),
    )(x_t, u_t, an_b_t, an_s_t, inv_w, w1t, b1t, w2t, b2t)

    # ---- glue: data-independent log-det terms + per-sample reduce (tiny; stays in XLA)
    pixels = H * W
    inv_logdets = jax.vmap(lambda m: jnp.linalg.slogdet(m)[1])(inv_w)
    const_ld = pixels * (jnp.sum(an_logs) + jnp.sum(inv_logdets))
    coupling_ld = ld_row[0, :T].reshape(N, pixels).sum(axis=1)
    logdet = logdet0 + const_ld + coupling_ld

    z = jnp.transpose(z_t[:, :T].reshape(C, N, H, W), (1, 0, 2, 3))
    return z, logdet


# --------------------------- parameter creation ---------------------------- #
def make_params(S, C, Ccond, Hd, key):
    ks = jax.random.split(key, 7)
    an_b = 0.10 * jax.random.normal(ks[0], (S, 1, C), jnp.float32)
    an_logs = 0.05 * jax.random.normal(ks[1], (S, 1, C), jnp.float32)
    # invertible 1x1 conv weights: random orthogonal per step (always invertible)
    raw = jax.random.normal(ks[2], (S, C, C), jnp.float32)
    inv_w = jax.vmap(lambda m: jnp.linalg.qr(m)[0])(raw)
    w1 = jax.random.normal(ks[3], (S, Ccond, Hd), jnp.float32) / jnp.sqrt(Ccond)
    b1 = 0.01 * jax.random.normal(ks[4], (S, 1, Hd), jnp.float32)
    w2 = 0.10 * jax.random.normal(ks[5], (S, Hd, 2 * C), jnp.float32)
    b2 = 0.01 * jax.random.normal(ks[6], (S, 1, 2 * C), jnp.float32)
    return an_b, an_logs, inv_w, w1, b1, w2, b2


# ------------------------------ pure-JAX ref -------------------------------- #
def _reference(gt, cond_fea, params, logdet0=0.0):
    an_b, an_logs, inv_w, w1, b1, w2, b2 = params
    N, C, H, W = gt.shape
    Ccond = cond_fea.shape[1]
    S = an_b.shape[0]
    z = jnp.transpose(gt, (0, 2, 3, 1)).reshape(N * H * W, C)
    u = jnp.transpose(cond_fea, (0, 2, 3, 1)).reshape(N * H * W, Ccond)
    ld = jnp.zeros((N * H * W, 1), jnp.float32)
    const = 0.0
    for s in range(S):
        z = (z + an_b[s]) * jnp.exp(an_logs[s])
        const = const + H * W * jnp.sum(an_logs[s])
        z = z @ inv_w[s].T
        const = const + H * W * jnp.linalg.slogdet(inv_w[s])[1]
        h = jnp.maximum(u @ w1[s] + b1[s], 0.0)
        st = h @ w2[s] + b2[s]
        shift, scale = st[:, :C], jax.nn.sigmoid(st[:, C:] + 2.0)
        z = (z + shift) * scale
        ld = ld + jnp.sum(jnp.log(scale), axis=-1, keepdims=True)
    logdet = logdet0 + const + ld.reshape(N, H * W).sum(axis=1)
    zout = jnp.transpose(z.reshape(N, H, W, C), (0, 3, 1, 2))
    return zout, logdet


# ---------------------------------- main ------------------------------------ #
if __name__ == "__main__":
    # Small shapes consistent with the module: image_shape = (H, W, C) = (16, 16, 8),
    # cond_fea channels = n_rrdb = 64 (stackRRDB blocks = None), hidden = 32,
    # L = 1 level, K = 2 flow steps per level -> S = 2 FlowSteps total.
    # TODO(synk): FlowStep source is not provided; each step uses the standard Glow/SRFlow
    #             recipe (ActNorm -> invertible 1x1 conv -> conditional affine coupling).
    N, C, H, W = 2, 8, 16, 16
    Ccond, Hd = 64, 32
    L, K = 1, 2
    S = L * K

    key = jax.random.PRNGKey(0)
    k_x, k_c, k_p = jax.random.split(key, 3)
    gt = jax.random.normal(k_x, (N, C, H, W), jnp.float32)
    cond_fea = jax.random.normal(k_c, (N, Ccond, H, W), jnp.float32)
    params = make_params(S, C, Ccond, Hd, k_p)

    z, logdet = jax.jit(functools.partial(flow1dnet_encode, params=params))(gt, cond_fea)
    jax.block_until_ready((z, logdet))

    z_ref, ld_ref = _reference(gt, cond_fea, params)
    assert z.shape == gt.shape and logdet.shape == (N,)
    assert jnp.allclose(z, z_ref, rtol=1e-3, atol=1e-3)
    assert jnp.allclose(logdet, ld_ref, rtol=1e-3, atol=1e-3)

    print("KERNEL_OK")
</pallas_src>

<mosaic_0001>
module attributes {stable_mosaic.version = 11 : i64} {
  func.func @_flowsteps_kernel(%arg0: i32, %arg1: memref<8x512xf32, #tpu.memory_space<vmem>>, %arg2: memref<64x512xf32, #tpu.memory_space<vmem>>, %arg3: memref<2x8x1xf32, #tpu.memory_space<vmem>>, %arg4: memref<2x8x1xf32, #tpu.memory_space<vmem>>, %arg5: memref<2x8x8xf32, #tpu.memory_space<vmem>>, %arg6: memref<64x64xf32, #tpu.memory_space<vmem>>, %arg7: memref<64x1xf32, #tpu.memory_space<vmem>>, %arg8: memref<2x16x32xf32, #tpu.memory_space<vmem>>, %arg9: memref<2x16x1xf32, #tpu.memory_space<vmem>>, %arg10: memref<8x512xf32, #tpu.memory_space<vmem>>, %arg11: memref<1x512xf32, #tpu.memory_space<vmem>>) attributes {dimension_semantics = [#tpu.dimension_semantics<parallel>], iteration_bounds = array<i64: 1>, scalar_prefetch = 0 : i64, scratch_operands = 0 : i64, tpu.core_type = #tpu.core_type<tc>, window_params = [{transform_indices = @transform_0, window_bounds = array<i64: 8, 512>}, {transform_indices = @transform_1, window_bounds = array<i64: 64, 512>}, {pipeline_mode = #tpu.pipeline_mode<synchronous>, transform_indices = @transform_2, window_bounds = array<i64: 2, 8, 1>}, {pipeline_mode = #tpu.pipeline_mode<synchronous>, transform_indices = @transform_3, window_bounds = array<i64: 2, 8, 1>}, {pipeline_mode = #tpu.pipeline_mode<synchronous>, transform_indices = @transform_4, window_bounds = array<i64: 2, 8, 8>}, {pipeline_mode = #tpu.pipeline_mode<synchronous>, transform_indices = @transform_5, window_bounds = array<i64: 64, 64>}, {pipeline_mode = #tpu.pipeline_mode<synchronous>, transform_indices = @transform_6, window_bounds = array<i64: 64, 1>}, {pipeline_mode = #tpu.pipeline_mode<synchronous>, transform_indices = @transform_7, window_bounds = array<i64: 2, 16, 32>}, {pipeline_mode = #tpu.pipeline_mode<synchronous>, transform_indices = @transform_8, window_bounds = array<i64: 2, 16, 1>}, {transform_indices = @transform_9, window_bounds = array<i64: 8, 512>}, {transform_indices = @transform_10, window_bounds = array<i64: 1, 512>}]} {
    %c0 = arith.constant 0 : index
    %c0_0 = arith.constant 0 : index
    %0 = vector.load %arg2[%c0, %c0_0] : memref<64x512xf32, #tpu.memory_space<vmem>>, vector<64x512xf32>
    %c0_1 = arith.constant 0 : index
    %c0_2 = arith.constant 0 : index
    %1 = vector.load %arg6[%c0_1, %c0_2] : memref<64x64xf32, #tpu.memory_space<vmem>>, vector<64x64xf32>
    %cst = arith.constant dense<0.000000e+00> : vector<64x512xf32>
    %2 = tpu.matmul %1, %0, %cst {dimension_numbers = #tpu.dot_dimension_numbers<[1], [0], [0], [1], [0, 0, 1, 1], [], []>} : vector<64x64xf32>, vector<64x512xf32>, vector<64x512xf32> -> vector<64x512xf32>
    %c0_3 = arith.constant 0 : index
    %c0_4 = arith.constant 0 : index
    %3 = vector.load %arg7[%c0_3, %c0_4] : memref<64x1xf32, #tpu.memory_space<vmem>>, vector<64x1xf32>
    %4 = vector.broadcast %3 : vector<64x1xf32> to vector<64x512xf32>
    %5 = arith.addf %2, %4 : vector<64x512xf32>
    %cst_5 = arith.constant 0.000000e+00 : f32
    %6 = vector.broadcast %cst_5 : f32 to vector<64x512xf32>
    %7 = arith.maximumf %5, %6 : vector<64x512xf32>
    %c0_6 = arith.constant 0 : index
    %c0_7 = arith.constant 0 : index
    %c0_8 = arith.constant 0 : index
    %8 = vector.load %arg8[%c0_6, %c0_7, %c0_8] : memref<2x16x32xf32, #tpu.memory_space<vmem>>, vector<1x16x32xf32>
    %9 = vector.shape_cast %8 : vector<1x16x32xf32> to vector<16x32xf32>
    %10 = vector.extract_strided_slice %7 {offsets = [0, 0], sizes = [32, 512], strides = [1, 1]} : vector<64x512xf32> to vector<32x512xf32>
    %cst_9 = arith.constant dense<0.000000e+00> : vector<16x512xf32>
    %11 = tpu.matmul %9, %10, %cst_9 {dimension_numbers = #tpu.dot_dimension_numbers<[1], [0], [0], [1], [0, 0, 1, 1], [], []>} : vector<16x32xf32>, vector<32x512xf32>, vector<16x512xf32> -> vector<16x512xf32>
    %c0_10 = arith.constant 0 : index
    %c0_11 = arith.constant 0 : index
    %c0_12 = arith.constant 0 : index
    %12 = vector.load %arg9[%c0_10, %c0_11, %c0_12] : memref<2x16x1xf32, #tpu.memory_space<vmem>>, vector<1x16x1xf32>
    %13 = vector.shape_cast %12 : vector<1x16x1xf32> to vector<16x1xf32>
    %14 = vector.broadcast %13 : vector<16x1xf32> to vector<16x512xf32>
    %15 = arith.addf %11, %14 : vector<16x512xf32>
    %16 = vector.extract_strided_slice %15 {offsets = [8, 0], sizes = [8, 512], strides = [1, 1]} : vector<16x512xf32> to vector<8x512xf32>
    %cst_13 = arith.constant 2.000000e+00 : f32
    %17 = vector.broadcast %cst_13 : f32 to vector<8x512xf32>
    %18 = arith.addf %16, %17 : vector<8x512xf32>
    %cst_14 = arith.constant 0.000000e+00 : f32
    %19 = vector.broadcast %cst_14 : f32 to vector<8x512xf32>
    %20 = arith.subf %19, %18 : vector<8x512xf32>
    %cst_15 = arith.constant 0.000000e+00 : f32
    %21 = vector.broadcast %cst_15 : f32 to vector<8x512xf32>
    %22 = arith.maximumf %20, %21 : vector<8x512xf32>
    %23 = math.absf %18 : vector<8x512xf32>
    %cst_16 = arith.constant 0.000000e+00 : f32
    %24 = vector.broadcast %cst_16 : f32 to vector<8x512xf32>
    %25 = arith.subf %24, %23 : vector<8x512xf32>
    %26 = math.exp %25 : vector<8x512xf32>
    %cst_17 = arith.constant 1.000000e+00 : f32
    %27 = vector.broadcast %cst_17 : f32 to vector<8x512xf32>
    %28 = arith.addf %27, %26 : vector<8x512xf32>
    %29 = math.log %28 : vector<8x512xf32>
    %30 = arith.addf %22, %29 : vector<8x512xf32>
    %cst_18 = arith.constant 0.000000e+00 : f32
    %31 = vector.broadcast %cst_18 : f32 to vector<8x512xf32>
    %32 = arith.subf %31, %30 : vector<8x512xf32>
    %33 = vector.extract_strided_slice %15 {offsets = [0, 0], sizes = [8, 512], strides = [1, 1]} : vector<16x512xf32> to vector<8x512xf32>
    %34 = math.exp %32 : vector<8x512xf32>
    %c1 = arith.constant 1 : index
    %c0_19 = arith.constant 0 : index
    %c0_20 = arith.constant 0 : index
    %35 = vector.load %arg8[%c1, %c0_19, %c0_20] : memref<2x16x32xf32, #tpu.memory_space<vmem>>, vector<1x16x32xf32>
    %36 = vector.shape_cast %35 : vector<1x16x32xf32> to vector<16x32xf32>
    %37 = vector.extract_strided_slice %7 {offsets = [32, 0], sizes = [32, 512], strides = [1, 1]} : vector<64x512xf32> to vector<32x512xf32>
    %cst_21 = arith.constant dense<0.000000e+00> : vector<16x512xf32>
    %38 = tpu.matmul %36, %37, %cst_21 {dimension_numbers = #tpu.dot_dimension_numbers<[1], [0], [0], [1], [0, 0, 1, 1], [], []>} : vector<16x32xf32>, vector<32x512xf32>, vector<16x512xf32> -> vector<16x512xf32>
    %c1_22 = arith.constant 1 : index
    %c0_23 = arith.constant 0 : index
    %c0_24 = arith.constant 0 : index
    %39 = vector.load %arg9[%c1_22, %c0_23, %c0_24] : memref<2x16x1xf32, #tpu.memory_space<vmem>>, vector<1x16x1xf32>
    %40 = vector.shape_cast %39 : vector<1x16x1xf32> to vector<16x1xf32>
    %41 = vector.broadcast %40 : vector<16x1xf32> to vector<16x512xf32>
    %42 = arith.addf %38, %41 : vector<16x512xf32>
    %43 = vector.extract_strided_slice %42 {offsets = [8, 0], sizes = [8, 512], strides = [1, 1]} : vector<16x512xf32> to vector<8x512xf32>
    %cst_25 = arith.constant 2.000000e+00 : f32
    %44 = vector.broadcast %cst_25 : f32 to vector<8x512xf32>
    %45 = arith.addf %43, %44 : vector<8x512xf32>
    %cst_26 = arith.constant 0.000000e+00 : f32
    %46 = vector.broadcast %cst_26 : f32 to vector<8x512xf32>
    %47 = arith.subf %46, %45 : vector<8x512xf32>
    %cst_27 = arith.constant 0.000000e+00 : f32
    %48 = vector.broadcast %cst_27 : f32 to vector<8x512xf32>
    %49 = arith.maximumf %47, %48 : vector<8x512xf32>
    %50 = math.absf %45 : vector<8x512xf32>
    %cst_28 = arith.constant 0.000000e+00 : f32
    %51 = vector.broadcast %cst_28 : f32 to vector<8x512xf32>
    %52 = arith.subf %51, %50 : vector<8x512xf32>
    %53 = math.exp %52 : vector<8x512xf32>
    %cst_29 = arith.constant 1.000000e+00 : f32
    %54 = vector.broadcast %cst_29 : f32 to vector<8x512xf32>
    %55 = arith.addf %54, %53 : vector<8x512xf32>
    %56 = math.log %55 : vector<8x512xf32>
    %57 = arith.addf %49, %56 : vector<8x512xf32>
    %cst_30 = arith.constant 0.000000e+00 : f32
    %58 = vector.broadcast %cst_30 : f32 to vector<8x512xf32>
    %59 = arith.subf %58, %57 : vector<8x512xf32>
    %60 = vector.extract_strided_slice %42 {offsets = [0, 0], sizes = [8, 512], strides = [1, 1]} : vector<16x512xf32> to vector<8x512xf32>
    %61 = math.exp %59 : vector<8x512xf32>
    %c0_31 = arith.constant 0 : index
    %c0_32 = arith.constant 0 : index
    %62 = vector.load %arg1[%c0_31, %c0_32] : memref<8x512xf32, #tpu.memory_space<vmem>>, vector<8x512xf32>
    %c0_33 = arith.constant 0 : index
    %c0_34 = arith.constant 0 : index
    %c0_35 = arith.constant 0 : index
    %63 = vector.load %arg3[%c0_33, %c0_34, %c0_35] : memref<2x8x1xf32, #tpu.memory_space<vmem>>, vector<1x8x1xf32>
    %64 = vector.shape_cast %63 : vector<1x8x1xf32> to vector<8x1xf32>
    %65 = vector.broadcast %64 : vector<8x1xf32> to vector<8x512xf32>
    %66 = arith.addf %62, %65 : vector<8x512xf32>
    %c0_36 = arith.constant 0 : index
    %c0_37 = arith.constant 0 : index
    %c0_38 = arith.constant 0 : index
    %67 = vector.load %arg4[%c0_36, %c0_37, %c0_38] : memref<2x8x1xf32, #tpu.memory_space<vmem>>, vector<1x8x1xf32>
    %68 = vector.shape_cast %67 : vector<1x8x1xf32> to vector<8x1xf32>
    %69 = vector.broadcast %68 : vector<8x1xf32> to vector<8x512xf32>
    %70 = arith.mulf %66, %69 : vector<8x512xf32>
    %c0_39 = arith.constant 0 : index
    %c0_40 = arith.constant 0 : index
    %c0_41 = arith.constant 0 : index
    %71 = vector.load %arg5[%c0_39, %c0_40, %c0_41] : memref<2x8x8xf32, #tpu.memory_space<vmem>>, vector<1x8x8xf32>
    %72 = vector.shape_cast %71 : vector<1x8x8xf32> to vector<8x8xf32>
    %cst_42 = arith.constant dense<0.000000e+00> : vector<8x512xf32>
    %73 = tpu.matmul %72, %70, %cst_42 {dimension_numbers = #tpu.dot_dimension_numbers<[1], [0], [0], [1], [0, 0, 1, 1], [], []>} : vector<8x8xf32>, vector<8x512xf32>, vector<8x512xf32> -> vector<8x512xf32>
    %74 = arith.addf %73, %33 : vector<8x512xf32>
    %75 = arith.mulf %74, %34 : vector<8x512xf32>
    %c1_43 = arith.constant 1 : index
    %c0_44 = arith.constant 0 : index
    %c0_45 = arith.constant 0 : index
    %76 = vector.load %arg3[%c1_43, %c0_44, %c0_45] : memref<2x8x1xf32, #tpu.memory_space<vmem>>, vector<1x8x1xf32>
    %77 = vector.shape_cast %76 : vector<1x8x1xf32> to vector<8x1xf32>
    %78 = vector.broadcast %77 : vector<8x1xf32> to vector<8x512xf32>
    %79 = arith.addf %75, %78 : vector<8x512xf32>
    %c1_46 = arith.constant 1 : index
    %c0_47 = arith.constant 0 : index
    %c0_48 = arith.constant 0 : index
    %80 = vector.load %arg4[%c1_46, %c0_47, %c0_48] : memref<2x8x1xf32, #tpu.memory_space<vmem>>, vector<1x8x1xf32>
    %81 = vector.shape_cast %80 : vector<1x8x1xf32> to vector<8x1xf32>
    %82 = vector.broadcast %81 : vector<8x1xf32> to vector<8x512xf32>
    %83 = arith.mulf %79, %82 : vector<8x512xf32>
    %c1_49 = arith.constant 1 : index
    %c0_50 = arith.constant 0 : index
    %c0_51 = arith.constant 0 : index
    %84 = vector.load %arg5[%c1_49, %c0_50, %c0_51] : memref<2x8x8xf32, #tpu.memory_space<vmem>>, vector<1x8x8xf32>
    %85 = vector.shape_cast %84 : vector<1x8x8xf32> to vector<8x8xf32>
    %cst_52 = arith.constant dense<0.000000e+00> : vector<8x512xf32>
    %86 = tpu.matmul %85, %83, %cst_52 {dimension_numbers = #tpu.dot_dimension_numbers<[1], [0], [0], [1], [0, 0, 1, 1], [], []>} : vector<8x8xf32>, vector<8x512xf32>, vector<8x512xf32> -> vector<8x512xf32>
    %87 = arith.addf %86, %60 : vector<8x512xf32>
    %88 = arith.mulf %87, %61 : vector<8x512xf32>
    %89 = arith.addf %32, %59 : vector<8x512xf32>
    %c0_53 = arith.constant 0 : index
    %c0_54 = arith.constant 0 : index
    %90 = vector.load %arg10[%c0_53, %c0_54] : memref<8x512xf32, #tpu.memory_space<vmem>>, vector<8x512xf32>
    tpu.vector_store %arg10[%c0_53, %c0_54], %88 {strides = array<i32>} : memref<8x512xf32, #tpu.memory_space<vmem>>, vector<8x512xf32>,
    %cst_55 = arith.constant dense<0.000000e+00> : vector<512xf32>
    %91 = vector.multi_reduction <add>, %89, %cst_55 [0] : vector<8x512xf32> to vector<512xf32>
    %92 = vector.shape_cast %91 : vector<512xf32> to vector<1x512xf32>
    %c0_56 = arith.constant 0 : index
    %c0_57 = arith.constant 0 : index
    %93 = vector.load %arg11[%c0_56, %c0_57] : memref<1x512xf32, #tpu.memory_space<vmem>>, vector<1x512xf32>
    tpu.vector_store %arg11[%c0_56, %c0_57], %92 {strides = array<i32>} : memref<1x512xf32, #tpu.memory_space<vmem>>, vector<1x512xf32>,
    return
  }
  func.func @transform_0(%arg0: i32) -> (i32, i32) {
    %c0_i32 = arith.constant 0 : i32
    %c0_i32_0 = arith.constant 0 : i32
    return %c0_i32, %arg0 : i32, i32
  }
  func.func @transform_1(%arg0: i32) -> (i32, i32) {
    %c0_i32 = arith.constant 0 : i32
    %c0_i32_0 = arith.constant 0 : i32
    return %c0_i32, %arg0 : i32, i32
  }
  func.func @transform_2(%arg0: i32) -> (i32, i32, i32) {
    %c0_i32 = arith.constant 0 : i32
    %c0_i32_0 = arith.constant 0 : i32
    %c0_i32_1 = arith.constant 0 : i32
    %c0_i32_2 = arith.constant 0 : i32
    return %c0_i32, %c0_i32_0, %c0_i32_1 : i32, i32, i32
  }
  func.func @transform_3(%arg0: i32) -> (i32, i32, i32) {
    %c0_i32 = arith.constant 0 : i32
    %c0_i32_0 = arith.constant 0 : i32
    %c0_i32_1 = arith.constant 0 : i32
    %c0_i32_2 = arith.constant 0 : i32
    return %c0_i32, %c0_i32_0, %c0_i32_1 : i32, i32, i32
  }
  func.func @transform_4(%arg0: i32) -> (i32, i32, i32) {
    %c0_i32 = arith.constant 0 : i32
    %c0_i32_0 = arith.constant 0 : i32
    %c0_i32_1 = arith.constant 0 : i32
    %c0_i32_2 = arith.constant 0 : i32
    return %c0_i32, %c0_i32_0, %c0_i32_1 : i32, i32, i32
  }
  func.func @transform_5(%arg0: i32) -> (i32, i32) {
    %c0_i32 = arith.constant 0 : i32
    %c0_i32_0 = arith.constant 0 : i32
    %c0_i32_1 = arith.constant 0 : i32
    return %c0_i32, %c0_i32_0 : i32, i32
  }
  func.func @transform_6(%arg0: i32) -> (i32, i32) {
    %c0_i32 = arith.constant 0 : i32
    %c0_i32_0 = arith.constant 0 : i32
    %c0_i32_1 = arith.constant 0 : i32
    return %c0_i32, %c0_i32_0 : i32, i32
  }
  func.func @transform_7(%arg0: i32) -> (i32, i32, i32) {
    %c0_i32 = arith.constant 0 : i32
    %c0_i32_0 = arith.constant 0 : i32
    %c0_i32_1 = arith.constant 0 : i32
    %c0_i32_2 = arith.constant 0 : i32
    return %c0_i32, %c0_i32_0, %c0_i32_1 : i32, i32, i32
  }
  func.func @transform_8(%arg0: i32) -> (i32, i32, i32) {
    %c0_i32 = arith.constant 0 : i32
    %c0_i32_0 = arith.constant 0 : i32
    %c0_i32_1 = arith.constant 0 : i32
    %c0_i32_2 = arith.constant 0 : i32
    return %c0_i32, %c0_i32_0, %c0_i32_1 : i32, i32, i32
  }
  func.func @transform_9(%arg0: i32) -> (i32, i32) {
    %c0_i32 = arith.constant 0 : i32
    %c0_i32_0 = arith.constant 0 : i32
    return %c0_i32, %arg0 : i32, i32
  }
  func.func @transform_10(%arg0: i32) -> (i32, i32) {
    %c0_i32 = arith.constant 0 : i32
    %c0_i32_0 = arith.constant 0 : i32
    return %c0_i32, %arg0 : i32, i32
  }
}

</mosaic_0001>

<llo_original>
// kernel: custom-call.2
$region0: #{custom-call.2}
  %s0 = inlined_call_operand.hbm [shape: f32[2,8,8], index: 0, kind: input, shape index: {}]
  %s1 = inlined_call_operand.vmem [shape: f32[2,8,8], index: 1, kind: output, shape index: {0}]
  %s2 = inlined_call_operand.hbm [shape: s32[2,8], index: 2, kind: output, shape index: {1}]
  %s3 = inlined_call_operand.hbm [shape: s32[2,8], index: 3, kind: output, shape index: {2}]
  %4 = xla_tuple %s1, %s2, %s3
  $region1: #{custom-call.2} parent=0
    #allocation0 [shape = 'u8[8192]{0}', space=vmem, size = 0x2000, scoped, tag = 'operand span for operand 0']
    #allocation1 [shape = 's32[2]{0}', space=sflag, size = 0x8, scoped, tag = 'scoped memory for custom-call.2']
    #allocation2 [shape = 's32[2]{0}', space=sflag, size = 0x8, scoped, tag = 'scoped memory for custom-call.2']
    #allocation3 [shape = 'u8[8192]{0}', space=vmem, size = 0x2000, scoped, tag = 'operand span for operand 1']
    #allocation4 [shape = 'u8[4096]{0}', space=vmem, size = 0x1000, scoped, tag = 'operand span for operand 2']
    #allocation5 [shape = 'u8[2048]{0}', space=vmem, size = 0x800, scoped, tag = 'packed  for operand 2']
    #allocation6 [shape = 'u8[4096]{0}', space=vmem, size = 0x1000, scoped, tag = 'operand span for operand 3']
    #allocation7 [shape = 'u8[2048]{0}', space=vmem, size = 0x800, scoped, tag = 'packed  for operand 3']
    #allocation8 [shape = 's32[2]{0}', space=sflag, size = 0x8, scoped, tag = 'scoped memory for custom-call.2']
    %5 = vsyncpa [#allocation1], 0
    %s6 = scalar_lea.sflag [#allocation1], 1
    %7 = vsyncpa %s6, 0
    %8 = vsyncpa [#allocation2], 0
    %s9 = scalar_lea.sflag [#allocation2], 1
    %10 = vsyncpa %s9, 0
    %11 = vsyncpa [#allocation8], 0
    %s12 = scalar_lea.sflag [#allocation8], 1
    %13 = vsyncpa %s12, 0
    loop: start=0, step=1, limit=4
    $region2: #{custom-call.2} parent=1 // loop_pre_header
      _
    $region3: #{custom-call.2} parent=1 // loop_header
      %s15 = sphi 0, %s19
      %p16 = scmp.ge.s32.totalorder %s15, 4
      %s27 = sphi 0, %s29
      %s30 = sphi 0, %s27
      %s31 = sphi 0, %s30
      %s47 = sphi 0, %s31
      %s55 = sphi 0, %s57
      %s58 = sphi 0, %s55
      %s59 = sphi 0, %s58
      %s75 = sphi 0, %s59
    $region4: #{custom-call.2} parent=1 // loop_header_branch
      %18 = sbr.rel (%p16) target = $region8
    $region5: #{custom-call.2} parent=1 // loop_body
      %s20 = ssub.s32 %s15, 1
      %s21 = ssub.s32 %s15, 2
      %s22 = sadd.s32 %s15, 1
      %s23 = sshrl.u32 %s15, 3
      %s24 = sshrl.u32 %s22, 3
      %s25 = ssub.s32 %s23, %s24
      %p26 = scmp.eq.s32.totalorder %s25, 0
      %s28 = sadd.s32 %s27, 1
      %s29 = scalar_select %p26, %s27, %s28
      %p32 = pneg %p26
      %p33 = scmp.eq.s32.totalorder %s15, 1
      %p34 = por %p32, %p33
      %p35 = scmp.ne.s32.totalorder %s27, %s30
      %p36 = scmp.eq.s32.totalorder %s15, 0
      %p37 = por %p35, %p36
      %p38 = scmp.ne.s32.totalorder %s27, %s30
      %p39 = scmp.eq.s32.totalorder %s20, 1
      %p40 = por %p38, %p39
      %p41 = scmp.ne.s32.totalorder %s30, %s31
      %p42 = scmp.eq.s32.totalorder %s20, 0
      %p43 = por %p41, %p42
      %p44 = scmp.ne.s32.totalorder %s30, %s31
      %p45 = scmp.eq.s32.totalorder %s21, 1
      %p46 = por %p44, %p45
      %p48 = scmp.ne.s32.totalorder %s31, %s47
      %p49 = scmp.eq.s32.totalorder %s21, 0
      %p50 = por %p48, %p49
      %s51 = sshrl.u32 %s15, 3
      %s52 = sshrl.u32 %s22, 3
      %s53 = ssub.s32 %s51, %s52
      %p54 = scmp.eq.s32.totalorder %s53, 0
      %s56 = sadd.s32 %s55, 1
      %s57 = scalar_select %p54, %s55, %s56
      %p60 = pneg %p54
      %p61 = scmp.eq.s32.totalorder %s15, 1
      %p62 = por %p60, %p61
      %p63 = scmp.ne.s32.totalorder %s55, %s58
      %p64 = scmp.eq.s32.totalorder %s15, 0
      %p65 = por %p63, %p64
      %p66 = scmp.ne.s32.totalorder %s55, %s58
      %p67 = scmp.eq.s32.totalorder %s20, 1
      %p68 = por %p66, %p67
      %p69 = scmp.ne.s32.totalorder %s58, %s59
      %p70 = scmp.eq.s32.totalorder %s20, 0
      %p71 = por %p69, %p70
      %p72 = scmp.ne.s32.totalorder %s58, %s59
      %p73 = scmp.eq.s32.totalorder %s21, 1
      %p74 = por %p72, %p73
      %p76 = scmp.ne.s32.totalorder %s59, %s75
      %p77 = scmp.eq.s32.totalorder %s21, 0
      %p78 = por %p76, %p77
      %p79 = scmp.le.s32.totalorder 1, %s15
      %p80 = scmp.lt.s32.totalorder %s15, 3
      %p81 = pnand %p79, %p80
      %p82 = pneg %p81
      // Predicated region
      $region9: #{custom-call.2} parent=5 // pred_check
        _
      $region10: #{custom-call.2} parent=5 // pred_check_branch
        %84 = sbr.rel (%p81) target = $region12
      $region11: #{custom-call.2} parent=5 // pred_region
        %s85 = ssub.s32 %s15, 1
      $region12: #{custom-call.2} parent=5 // pred_fallthru
        _
      %p86 = scmp.lt.s32.totalorder %s15, 2
      // Predicated region
      $region13: #{custom-call.2} parent=5 // pred_check
        %p87 = pneg %p86
      $region14: #{custom-call.2} parent=5 // pred_check_branch
        %89 = sbr.rel (%p87) target = $region16
      $region15: #{custom-call.2} parent=5 // pred_region
        %s90 = sand.u32 %s15, 1
        %s91 = scalar_lea.sflag [#allocation1], %s90
        %s92 = sand.u32 %s15, 1
        %s93 = smul.addr %s92, 8
        %s94 = scalar_lea.vmem [#allocation0], %s93
        %96 = vsyncadd %s91, 0
        %s97 = smul.addr %s15, 8
        %s98 = scalar_lea.hbm %s0, %s97
        %s100 = sshll.u32 %s98, 4
        %s101 = int_to_ptr.hbm [resolvable:$true] %s100
        %s102 = sshll.u32 %s94, 4
        %s103 = int_to_ptr.vmem [resolvable:$true] %s102
        %105 = dma.hbm_to_vmem [thread:$0]  %s101, 128, %s103, %s91
      $region16: #{custom-call.2} parent=5 // pred_fallthru
        _
      %p106 = scmp.le.s32.totalorder 1, %s15
      %p107 = scmp.lt.s32.totalorder %s15, 3
      %p108 = pnand %p106, %p107
      %p109 = pneg %p108
      // Predicated region
      $region17: #{custom-call.2} parent=5 // pred_check
        _
      $region18: #{custom-call.2} parent=5 // pred_check_branch
        %111 = sbr.rel (%p108) target = $region20
      $region19: #{custom-call.2} parent=5 // pred_region
        #allocation9 [shape = 's32[8,128]{1,0}', space=vmem, size = 0x1000, scoped, tag = 'scratch for permutations']
        %s112 = ssub.s32 %s15, 1
        %s113 = sand.u32 %s20, 1
        %s114 = scalar_lea.sflag [#allocation1], %s113
        %s115 = sand.u32 %s20, 1
        %s116 = smul.addr %s115, 8
        %s117 = scalar_lea.vmem [#allocation0], %s116
        %119 = dma.done %s114, 128
        %s120 = sand.u32 %s20, 1
        %s121 = scalar_lea.sflag [#allocation1], %s120
        %s122 = sand.u32 %s20, 1
        %s123 = smul.addr %s122, 8
        %s124 = scalar_lea.vmem [#allocation0], %s123
        %s125 = sand.u32 %s20, 1
        %s126 = sand.u32 %s20, 1
        %s127 = smul.addr %s126, 8
        %s128 = scalar_lea.vmem [#allocation3], %s127
        %p129 = pneg %p43
        %p130 = pneg %p40
        %s131 = sand.u32 %s30, 1
        %s132 = scalar_lea.sflag [#allocation2], %s131
        %s133 = sand.u32 %s30, 1
        %s134 = smul.addr %s133, 2
        %s135 = scalar_lea.vmem [#allocation5], %s134
        %p136 = pneg %p71
        %p137 = pneg %p68
        %s138 = sand.u32 %s58, 1
        %s139 = scalar_lea.sflag [#allocation8], %s138
        %s140 = sand.u32 %s58, 1
        %s141 = smul.addr %s140, 2
        %s142 = scalar_lea.vmem [#allocation7], %s141
        %s143 = sshrl.u32 %s20, 3
        %s144 = sshrl.u32 %s20, 3
        %v145 = vld [vmem:[%s117] sm:$0xff]
        %146 = vst [vmem:[%s128] sm:$0xff] %v145
        %s147 = sand.u32 %s20, 7
        %s148 = scalar_lea.vmem [#allocation4], %s147
        %s149 = sand.u32 %s20, 7
        %s150 = scalar_lea.vmem [#allocation6], %s149
        %151 = vst [vmem:[%s148] sm:$0x1] 0
        %v152 = vlaneseq
        %v153 = vshrl.u32 %v152, 7
        %v154 = vmov %v153
        %156 = vst [vmem:[#allocation9] sm:$0xff] %v154
        loop: start=0, step=1, limit=8
        $region22: #{custom-call.2} parent=19 // loop_pre_header
          _
        $region23: #{custom-call.2} parent=19 // loop_header
          %s158 = sphi 0, %s162
          %p159 = scmp.ge.s32.totalorder %s158, 8
        $region24: #{custom-call.2} parent=19 // loop_header_branch
          %161 = sbr.rel (%p159) target = $region28
        $region25: #{custom-call.2} parent=19 // loop_body
          %v163 = vstv %s158
          %v164 = vlaneseq
          %v165 = vshrl.u32 %v164, 7
          %v166 = vmov %v165
          %v167 = vld [vmem:[%s128] sm:$0xff]
          %v168 = vand.u32 2147483647, %v167
          %v170 = vstv %s158
          %vm171 = vcmp.ge.s32.totalorder %v166, %v170
          %vm172 = vcmp.lt.s32.totalorder %v166, 8
          %vm173 = vmand %vm171, %vm172
          %vm174 = vcmp.lt.f32.partialorder -inf, %v168
          %vm175 = vmand %vm173, %vm174
          %v176 = vsel %vm175, %v166, %v163
          %v177 = vsel %vm175, %v168, -inf
          %v178 = vrot.slane %v177, 1
          %v179 = vrot.slane %v176, 1
          %vm180 = vcmp.ge.f32.partialorder %v178, %v177
          %v181 = vsel %vm180, %v178, %v177
          %v182 = vsel %vm180, %v179, %v176
          %v183 = vrot.slane %v178, 1
          %v184 = vrot.slane %v179, 1
          %vm185 = vcmp.ge.f32.partialorder %v183, %v181
          %v186 = vsel %vm185, %v183, %v181
          %v187 = vsel %vm185, %v184, %v182
          %v188 = vrot.slane %v183, 1
          %v189 = vrot.slane %v184, 1
          %vm190 = vcmp.ge.f32.partialorder %v188, %v186
          %v191 = vsel %vm190, %v188, %v186
          %v192 = vsel %vm190, %v189, %v187
          %v193 = vrot.slane %v188, 1
          %v194 = vrot.slane %v189, 1
          %vm195 = vcmp.ge.f32.partialorder %v193, %v191
          %v196 = vsel %vm195, %v193, %v191
          %v197 = vsel %vm195, %v194, %v192
          %v198 = vrot.slane %v193, 1
          %v199 = vrot.slane %v194, 1
          %vm200 = vcmp.ge.f32.partialorder %v198, %v196
          %v201 = vsel %vm200, %v198, %v196
          %v202 = vsel %vm200, %v199, %v197
          %v203 = vrot.slane %v198, 1
          %v204 = vrot.slane %v199, 1
          %vm205 = vcmp.ge.f32.partialorder %v203, %v201
          %v206 = vsel %vm205, %v203, %v201
          %v207 = vsel %vm205, %v204, %v202
          %v208 = vrot.slane %v203, 1
          %v209 = vrot.slane %v204, 1
          %vm210 = vcmp.ge.f32.partialorder %v208, %v206
          %v211 = vsel %vm210, %v208, %v206
          %v212 = vsel %vm210, %v209, %v207
          %s213 = ssub.s32 128, %s158
          %214 = vrot.lane.b32.xlu0 %v212, %s213
          %v215 = vpop.permute.xlu0 %214
          %s216 = vtos %v215
          %v217 = vstv %s158
          %v218 = vlaneseq
          %v219 = vand.u32 %v218, 127
          %vm220 = vcmp.eq.s32.totalorder %v219, %v217
          %v221 = vstv %s216
          %v222 = vld [vmem:[%s148] ss:$0 sm:$0xff]
          %v223 = vsel %vm220, %v221, %v222
          %224 = vst [vmem:[%s148] sm:$0x1] %v223
          %s225 = scalar_lea.vmem %s128, %s158 [#allocation3]
          %s226 = scalar_lea.vmem %s128, %s216 [#allocation3]
          %v227 = vld [vmem:[%s225] ss:$0 sm:$0xff]
          %v228 = vld [vmem:[%s226] ss:$0 sm:$0xff]
          %229 = vst [vmem:[%s226] sm:$0x1] %v227
          %230 = vst [vmem:[%s225] sm:$0x1] %v228
          %s231 = scalar_lea.vmem [#allocation9], %s158
          %s232 = scalar_lea.vmem [#allocation9], %s216
          %v233 = vld [vmem:[%s231] ss:$0 sm:$0xff]
          %v234 = vld [vmem:[%s232] ss:$0 sm:$0xff]
          %235 = vst [vmem:[%s232] sm:$0x1] %v233
          %236 = vst [vmem:[%s231] sm:$0x1] %v234
          %vm237 = vcmp.ne.f32.partialorder %v228, 0.0
          %vm238 = vmand %vm220, %vm237
          %v239 = vsel %vm238, %v228, 1.0
          %v240 = vlaneseq
          %v241 = vand.u32 %v240, 127
          %v242 = vstv %s158
          %vm243 = vcmp.gt.s32.totalorder %v241, %v242
          %v244 = vsel %vm243, %v228, 0.0
          %v245 = vlaneseq
          %v246 = vshrl.u32 %v245, 7
          %v247 = vmov %v246
          %v248 = vld [vmem:[%s128] sm:$0xff]
          %v250 = vstv %s158
          %vm251 = vcmp.gt.s32.totalorder %v247, %v250
          %v252 = vsel %vm251, %v239, 1.0
          %v253 = vrcp.pop %v252
          %v254 = vmul.f32 %v252, %v253
          %v255 = vsub.f32 1.0, %v254
          %v256 = vmul.f32 %v253, %v255
          %v257 = vadd.f32 %v253, %v256
          %vm258 = vweird.f32 %v252
          %vm259 = vweird.f32 %v253
          %vm260 = vmor %vm258, %vm259
          %v261 = vsel %vm260, %v253, %v257
          %v262 = vand.u32 2147483647, %v252
          %vm263 = vcmp.eq.f32.partialorder %v262, 8.507059e+37
          %v264 = vand.u32 %v252, 2147483648
          %v265 = vor.u32 1.1754944e-38, %v264
          %v266 = vsel %vm263, %v265, %v261
          %v267 = vmul.f32 %v248, %v266
          %vm268 = vmand %vm251, %vm220
          %v269 = vsel %vm268, %v267, 0.0
          %270 = vadd.xlane.f32.xlu0 %v269
          %v271 = vpop.xlane.xlu0 %270
          %v272 = vmul.f32 %v271, %v244
          %v273 = vsub.f32 %v267, %v272
          %274 = vst [vmem:[%s128] sm:$0xff] %v273
        $region26: #{custom-call.2} parent=19 // loop_footer
          %s162 = sadd.s32 1, %s158
        $region27: #{custom-call.2} parent=19 // loop_footer_branch
          %157 = sbr.rel target = $region23
        $region28: #{custom-call.2} parent=19 // loop_exit
          _
        %v275 = vld [vmem:[#allocation9] sm:$0xff]
        %s276 = scalar_lea.vmem [#allocation9], 8
        %s277 = scalar_lea.vmem [#allocation9], 16
        %s278 = scalar_lea.vmem [#allocation9], 24
        %s279 = scalar_lea.vmem [#allocation9], 32
        %s280 = scalar_lea.vmem [#allocation9], 40
        %s281 = scalar_lea.vmem [#allocation9], 48
        %s282 = scalar_lea.vmem [#allocation9], 56
        %s283 = scalar_lea.vmem [#allocation9], 64
        %s284 = scalar_lea.vmem [#allocation9], 72
        %s285 = scalar_lea.vmem [#allocation9], 80
        %s286 = scalar_lea.vmem [#allocation9], 88
        %s287 = scalar_lea.vmem [#allocation9], 96
        %s288 = scalar_lea.vmem [#allocation9], 104
        %s289 = scalar_lea.vmem [#allocation9], 112
        %s290 = scalar_lea.vmem [#allocation9], 120
        %291 = vxpose.xlu0.b32.start [1/16] %v275, 128
        %292 = vxpose.xlu0.b32.cont [2/16] 0, 128
        %293 = vxpose.xlu0.b32.cont [3/16] 0, 128
        %294 = vxpose.xlu0.b32.cont [4/16] 0, 128
        %295 = vxpose.xlu0.b32.cont [5/16] 0, 128
        %296 = vxpose.xlu0.b32.cont [6/16] 0, 128
        %297 = vxpose.xlu0.b32.cont [7/16] 0, 128
        %298 = vxpose.xlu0.b32.cont [8/16] 0, 128
        %299 = vxpose.xlu0.b32.cont [9/16] 0, 128
        %300 = vxpose.xlu0.b32.cont [10/16] 0, 128
        %301 = vxpose.xlu0.b32.cont [11/16] 0, 128
        %302 = vxpose.xlu0.b32.cont [12/16] 0, 128
        %303 = vxpose.xlu0.b32.cont [13/16] 0, 128
        %304 = vxpose.xlu0.b32.cont [14/16] 0, 128
        %305 = vxpose.xlu0.b32.cont [15/16] 0, 128
        %306 = vxpose.xlu0.b32.end [16/16] 0, 128
        %v307 = vpop.trf.xlu0
        %v308 = vpop.trf.xlu0
        %v309 = vpop.trf.xlu0
        %v310 = vpop.trf.xlu0
        %v311 = vpop.trf.xlu0
        %v312 = vpop.trf.xlu0
        %v313 = vpop.trf.xlu0
        %v314 = vpop.trf.xlu0
        %v315 = vpop.trf.xlu0
        %v316 = vpop.trf.xlu0
        %v317 = vpop.trf.xlu0
        %v318 = vpop.trf.xlu0
        %v319 = vpop.trf.xlu0
        %v320 = vpop.trf.xlu0
        %v321 = vpop.trf.xlu0
        %v322 = vpop.trf.xlu0
        %323 = vst [vmem:[%s150] sm:$0x1] %v307
        %s325 = ssub.s32 4, 1
        %v326 = vld [vmem:[#allocation4] sm:%s325]
        %s328 = ssub.s32 4, 1
        %329 = vst [vmem:[%s135] sm:%s328] %v326
        %s331 = ssub.s32 4, 1
        %v332 = vld [vmem:[#allocation6] sm:%s331]
        %s334 = ssub.s32 4, 1
        %335 = vst [vmem:[%s142] sm:%s334] %v332
        %s336 = sand.u32 %s20, 1
        %s337 = sand.u32 %s20, 1
        %s338 = smul.addr %s337, 8
        %s339 = scalar_lea.vmem [#allocation3], %s338
        %s340 = sand.u32 %s30, 1
        %s341 = scalar_lea.sflag [#allocation2], %s340
        %s342 = sand.u32 %s30, 1
        %s343 = smul.addr %s342, 2
        %s344 = scalar_lea.vmem [#allocation5], %s343
        %s345 = sand.u32 %s58, 1
        %s346 = scalar_lea.sflag [#allocation8], %s345
        %s347 = sand.u32 %s58, 1
        %s348 = smul.addr %s347, 2
        %s349 = scalar_lea.vmem [#allocation7], %s348
        %s350 = smul.addr %s20, 8
        %s351 = scalar_lea.vmem %s1, %s350
        // Predicated region
        $region29: #{custom-call.2} parent=19 // pred_check
          _
        $region30: #{custom-call.2} parent=19 // pred_check_branch
          %353 = sbr.rel (0) target = $region32
        $region31: #{custom-call.2} parent=19 // pred_region
          // Predicated region
          $region33: #{custom-call.2} parent=31 // pred_check
            _
          $region34: #{custom-call.2} parent=31 // pred_check_branch
            %355 = sbr.rel (0) target = $region36
          $region35: #{custom-call.2} parent=31 // pred_region
            // Predicated region
            $region48: #{custom-call.2} parent=35 // pred_check
              _
            $region49: #{custom-call.2} parent=35 // pred_check_branch
              %371 = sbr.rel (0) target = $region51
            $region50: #{custom-call.2} parent=35 // pred_region
              loop: start=0, step=1, limit=1
              $region52: #{custom-call.2} parent=50 // loop_pre_header
                _
              $region53: #{custom-call.2} parent=50 // loop_header
                %s373 = sphi 0, %s377
                %p374 = scmp.ge.s32.totalorder %s373, 1
                %s378 = sphi %s339, %s339
                %s379 = sphi %s351, %s351
              $region54: #{custom-call.2} parent=50 // loop_header_branch
                %376 = sbr.rel (%p374) target = $region58
              $region55: #{custom-call.2} parent=50 // loop_body
                %v380 = vld [vmem:[%s378] sm:$0xff]
                %381 = vst [vmem:[%s379] sm:$0xff] %v380
              $region56: #{custom-call.2} parent=50 // loop_footer
                %s377 = sadd.s32 1, %s373
              $region57: #{custom-call.2} parent=50 // loop_footer_branch
                %372 = sbr.rel target = $region53
              $region58: #{custom-call.2} parent=50 // loop_exit
                _
            $region51: #{custom-call.2} parent=35 // pred_fallthru
              _
            // Predicated region
            $region59: #{custom-call.2} parent=35 // pred_check
              _
            $region60: #{custom-call.2} parent=35 // pred_check_branch
              %383 = sbr.rel target = $region62
            $region61: #{custom-call.2} parent=35 // pred_region
              _
            $region62: #{custom-call.2} parent=35 // pred_fallthru
              _
          $region36: #{custom-call.2} parent=31 // pred_fallthru
            _
          // Predicated region
          $region37: #{custom-call.2} parent=31 // pred_check
            _
          $region38: #{custom-call.2} parent=31 // pred_check_branch
            %357 = sbr.rel target = $region40
          $region39: #{custom-call.2} parent=31 // pred_region
            %s359 = ssub.s32 256, 1
            loop: start=0, step=1, limit=1
            $region41: #{custom-call.2} parent=39 // loop_pre_header
              _
            $region42: #{custom-call.2} parent=39 // loop_header
              %s361 = sphi 0, %s365
              %p362 = scmp.ge.s32.totalorder %s361, 1
              %s366 = sphi %s339, %s339
              %s367 = sphi %s351, %s351
            $region43: #{custom-call.2} parent=39 // loop_header_branch
              %364 = sbr.rel (%p362) target = $region47
            $region44: #{custom-call.2} parent=39 // loop_body
              %v368 = vld [vmem:[%s366] sm:%s359]
              %369 = vst [vmem:[%s367] sm:%s359] %v368
            $region45: #{custom-call.2} parent=39 // loop_footer
              %s365 = sadd.s32 1, %s361
            $region46: #{custom-call.2} parent=39 // loop_footer_branch
              %360 = sbr.rel target = $region42
            $region47: #{custom-call.2} parent=39 // loop_exit
              _
          $region40: #{custom-call.2} parent=31 // pred_fallthru
            _
        $region32: #{custom-call.2} parent=19 // pred_fallthru
          _
        %384 = vnop
        // Predicated region
        $region63: #{custom-call.2} parent=19 // pred_check
          %p385 = pneg %p40
        $region64: #{custom-call.2} parent=19 // pred_check_branch
          %387 = sbr.rel (%p385) target = $region66
        $region65: #{custom-call.2} parent=19 // pred_region
          %s388 = sshrl.u32 %s20, 3
          %390 = vsyncadd %s341, 0
          %s391 = smul.addr %s388, 2
          %s392 = scalar_lea.hbm %s2, %s391
          %s394 = sshll.u32 %s344, 4
          %s395 = int_to_ptr.vmem [resolvable:$true] %s394
          %s396 = sshll.u32 %s392, 4
          %s397 = int_to_ptr.hbm [resolvable:$true] %s396
          %399 = dma.vmem_to_hbm [thread:$0]  %s395, 32, %s397, %s341
        $region66: #{custom-call.2} parent=19 // pred_fallthru
          _
        // Predicated region
        $region67: #{custom-call.2} parent=19 // pred_check
          %p400 = pneg %p68
        $region68: #{custom-call.2} parent=19 // pred_check_branch
          %402 = sbr.rel (%p400) target = $region70
        $region69: #{custom-call.2} parent=19 // pred_region
          %s403 = sshrl.u32 %s20, 3
          %405 = vsyncadd %s346, 0
          %s406 = smul.addr %s403, 2
          %s407 = scalar_lea.hbm %s3, %s406
          %s409 = sshll.u32 %s349, 4
          %s410 = int_to_ptr.vmem [resolvable:$true] %s409
          %s411 = sshll.u32 %s407, 4
          %s412 = int_to_ptr.hbm [resolvable:$true] %s411
          %414 = dma.vmem_to_hbm [thread:$0]  %s410, 32, %s412, %s346
        $region70: #{custom-call.2} parent=19 // pred_fallthru
          _
      $region20: #{custom-call.2} parent=5 // pred_fallthru
        _
      %p415 = scmp.le.s32.totalorder 2, %s15
      // Predicated region
      $region71: #{custom-call.2} parent=5 // pred_check
        %p416 = pneg %p415
      $region72: #{custom-call.2} parent=5 // pred_check_branch
        %418 = sbr.rel (%p416) target = $region74
      $region73: #{custom-call.2} parent=5 // pred_region
        %s419 = ssub.s32 %s15, 2
        %s420 = sand.u32 %s21, 1
        %s421 = sand.u32 %s21, 1
        %s422 = smul.addr %s421, 8
        %s423 = scalar_lea.vmem [#allocation3], %s422
        // Predicated region
        $region75: #{custom-call.2} parent=73 // pred_check
          %p424 = pneg %p46
        $region76: #{custom-call.2} parent=73 // pred_check_branch
          %426 = sbr.rel (%p424) target = $region78
        $region77: #{custom-call.2} parent=73 // pred_region
          %s427 = sand.u32 %s31, 1
          %s428 = scalar_lea.sflag [#allocation2], %s427
          %s429 = sand.u32 %s31, 1
          %s430 = smul.addr %s429, 2
          %s431 = scalar_lea.vmem [#allocation5], %s430
          %433 = dma.done %s428, 32
        $region78: #{custom-call.2} parent=73 // pred_fallthru
          _
        // Predicated region
        $region79: #{custom-call.2} parent=73 // pred_check
          %p434 = pneg %p74
        $region80: #{custom-call.2} parent=73 // pred_check_branch
          %436 = sbr.rel (%p434) target = $region82
        $region81: #{custom-call.2} parent=73 // pred_region
          %s437 = sand.u32 %s59, 1
          %s438 = scalar_lea.sflag [#allocation8], %s437
          %s439 = sand.u32 %s59, 1
          %s440 = smul.addr %s439, 2
          %s441 = scalar_lea.vmem [#allocation7], %s440
          %443 = dma.done %s438, 32
        $region82: #{custom-call.2} parent=73 // pred_fallthru
          _
      $region74: #{custom-call.2} parent=5 // pred_fallthru
        _
    $region6: #{custom-call.2} parent=1 // loop_footer
      %s19 = sadd.s32 1, %s15
    $region7: #{custom-call.2} parent=1 // loop_footer_branch
      %14 = sbr.rel target = $region3
    $region8: #{custom-call.2} parent=1 // loop_exit
      _
    %444 = vsyncpa [#allocation1], 1
    %s445 = scalar_lea.sflag [#allocation1], 1
    %446 = vsyncpa %s445, 1
    %447 = vsyncpa [#allocation2], 1
    %s448 = scalar_lea.sflag [#allocation2], 1
    %449 = vsyncpa %s448, 1
    %450 = vsyncpa [#allocation8], 1
    %s451 = scalar_lea.sflag [#allocation8], 1
    %452 = vsyncpa %s451, 1

// kernel: squeeze.1
$region0: #{squeeze.1}
  %s0 = inlined_call_operand.vmem [shape: f32[512], index: 0, kind: input, shape index: {}]
  %s1 = inlined_call_operand.vmem [shape: f32[2,256], index: 1, kind: output, shape index: {}]
  $region1: #{squeeze.1} parent=0
    #allocation0 [shape = 'u8[8192]{0}', space=vmem, size = 0x2000, scoped, tag = 'scoped mem for output reshape']
    #allocation1 [shape = 'u8[4096]{0}', space=vmem, size = 0x1000, scoped, tag = 'scoped mem for input reshape']
    %s3 = ssub.s32 16, 1
    %v4 = vld [vmem:[%s0] sm:%s3]
    %5 = vst [vmem:[#allocation1] sm:%s3] %v4
    %v6 = vld [vmem:[#allocation1] sm:$0xf]
    %7 = vst [vmem:[#allocation0] ss:$8 sm:$0x3] %v6
    %s8 = scalar_lea.vmem [#allocation0], 4294967281
    %9 = vst [vmem:[%s8] ss:$8 sm:$0xc] %v6
    %s11 = ssub.s32 4, 1
    %v12 = vld [vmem:[#allocation0] sm:%s11]
    %s14 = ssub.s32 4, 1
    %15 = vst [vmem:[%s1] sm:%s14] %v12
    %s16 = scalar_lea.vmem [#allocation0], 8
    %v17 = vld [vmem:[%s16] sm:%s11]
    %s19 = ssub.s32 4, 1
    %s20 = scalar_lea.vmem %s1, 2
    %21 = vst [vmem:[%s20] sm:%s19] %v17

// kernel: flow1dnet_encode.1
$region0: #{flow1dnet_encode.1}
  #allocation0 [shape = 'u32[]', space=smem, size = 0x4, offset = 0x4, fixed_abs, tag = 'smem constant byte address 0x4 - core index']
  #allocation1 [shape = 'u32[72,128]{1,0:T(1,128)}', space=vmem, size = 0x9000, scoped, tag = 'internal scratch']
  %s0 = inlined_call_operand.vmem [shape: f32[8,512], index: 0, kind: input, shape index: {}]
  %s1 = inlined_call_operand.vmem [shape: f32[64,512], index: 1, kind: input, shape index: {}]
  %s2 = inlined_call_operand.vmem [shape: f32[2,8,1], index: 2, kind: input, shape index: {}]
  %s3 = inlined_call_operand.vmem [shape: f32[2,8,1], index: 3, kind: input, shape index: {}]
  %s4 = inlined_call_operand.vmem [shape: f32[2,8,8], index: 4, kind: input, shape index: {}]
  %s5 = inlined_call_operand.vmem [shape: f32[64,64], index: 5, kind: input, shape index: {}]
  %s6 = inlined_call_operand.vmem [shape: f32[64,1], index: 6, kind: input, shape index: {}]
  %s7 = inlined_call_operand.vmem [shape: f32[2,16,32], index: 7, kind: input, shape index: {}]
  %s8 = inlined_call_operand.vmem [shape: f32[2,16,1], index: 8, kind: input, shape index: {}]
  %s9 = inlined_call_operand.vmem [shape: f32[8,512], index: 9, kind: output, shape index: {0}]
  %s10 = inlined_call_operand.vmem [shape: f32[1,512], index: 10, kind: output, shape index: {1}]
  %11 = xla_tuple %s9, %s10
  %s12 = sld [smem:[#allocation0]]
  $region54: #{flow1dnet_encode.1} parent=0
    _
  %s14 = ssub.s32 1, %s12
  %s15 = scalar_select 0, %s14, %s12
  // Predicated region
  $region2: #{flow1dnet_encode.1} parent=0 // pred_check
    _
  $region3: #{flow1dnet_encode.1} parent=0 // pred_check_branch
    %17 = sbr.rel (0) target = $region5
  $region4: #{flow1dnet_encode.1} parent=0 // pred_region
    _
  $region5: #{flow1dnet_encode.1} parent=0 // pred_fallthru
    _
  // Predicated region
  $region6: #{flow1dnet_encode.1} parent=0 // pred_check
    _
  $region7: #{flow1dnet_encode.1} parent=0 // pred_check_branch
    %19 = sbr.rel (0) target = $region9
  $region8: #{flow1dnet_encode.1} parent=0 // pred_region
    _
  $region9: #{flow1dnet_encode.1} parent=0 // pred_fallthru
    _
  // Predicated region
  $region10: #{flow1dnet_encode.1} parent=0 // pred_check
    _
  $region11: #{flow1dnet_encode.1} parent=0 // pred_check_branch
    %21 = sbr.rel (0) target = $region13
  $region12: #{flow1dnet_encode.1} parent=0 // pred_region
    _
  $region13: #{flow1dnet_encode.1} parent=0 // pred_fallthru
    _
  // Predicated region
  $region14: #{flow1dnet_encode.1} parent=0 // pred_check
    _
  $region15: #{flow1dnet_encode.1} parent=0 // pred_check_branch
    %23 = sbr.rel (0) target = $region17
  $region16: #{flow1dnet_encode.1} parent=0 // pred_region
    _
  $region17: #{flow1dnet_encode.1} parent=0 // pred_fallthru
    _
  // Predicated region
  $region18: #{flow1dnet_encode.1} parent=0 // pred_check
    _
  $region19: #{flow1dnet_encode.1} parent=0 // pred_check_branch
    %25 = sbr.rel (0) target = $region21
  $region20: #{flow1dnet_encode.1} parent=0 // pred_region
    _
  $region21: #{flow1dnet_encode.1} parent=0 // pred_fallthru
    _
  // Predicated region
  $region22: #{flow1dnet_encode.1} parent=0 // pred_check
    _
  $region23: #{flow1dnet_encode.1} parent=0 // pred_check_branch
    %27 = sbr.rel (0) target = $region25
  $region24: #{flow1dnet_encode.1} parent=0 // pred_region
    _
  $region25: #{flow1dnet_encode.1} parent=0 // pred_fallthru
    _
  // Predicated region
  $region26: #{flow1dnet_encode.1} parent=0 // pred_check
    _
  $region27: #{flow1dnet_encode.1} parent=0 // pred_check_branch
    %29 = sbr.rel (0) target = $region29
  $region28: #{flow1dnet_encode.1} parent=0 // pred_region
    _
  $region29: #{flow1dnet_encode.1} parent=0 // pred_fallthru
    _
  // Predicated region
  $region30: #{flow1dnet_encode.1} parent=0 // pred_check
    _
  $region31: #{flow1dnet_encode.1} parent=0 // pred_check_branch
    %31 = sbr.rel (0) target = $region33
  $region32: #{flow1dnet_encode.1} parent=0 // pred_region
    _
  $region33: #{flow1dnet_encode.1} parent=0 // pred_fallthru
    _
  // Predicated region
  $region34: #{flow1dnet_encode.1} parent=0 // pred_check
    _
  $region35: #{flow1dnet_encode.1} parent=0 // pred_check_branch
    %33 = sbr.rel (0) target = $region37
  $region36: #{flow1dnet_encode.1} parent=0 // pred_region
    _
  $region37: #{flow1dnet_encode.1} parent=0 // pred_fallthru
    _
  %v34 = vld [vmem:[%s1] sm:$0xff]
  %v35 = vld [vmem:[%s1 + $0x8] sm:$0xff]
  %v36 = vld [vmem:[%s1 + $0x10] sm:$0xff]
  %v37 = vld [vmem:[%s1 + $0x18] sm:$0xff]
  %v38 = vld [vmem:[%s1 + $0x20] sm:$0xff]
  %v39 = vld [vmem:[%s1 + $0x28] sm:$0xff]
  %v40 = vld [vmem:[%s1 + $0x30] sm:$0xff]
  %v41 = vld [vmem:[%s1 + $0x38] sm:$0xff]
  %v42 = vld [vmem:[%s1 + $0x40] sm:$0xff]
  %v43 = vld [vmem:[%s1 + $0x48] sm:$0xff]
  %v44 = vld [vmem:[%s1 + $0x50] sm:$0xff]
  %v45 = vld [vmem:[%s1 + $0x58] sm:$0xff]
  %v46 = vld [vmem:[%s1 + $0x60] sm:$0xff]
  %v47 = vld [vmem:[%s1 + $0x68] sm:$0xff]
  %v48 = vld [vmem:[%s1 + $0x70] sm:$0xff]
  %v49 = vld [vmem:[%s1 + $0x78] sm:$0xff]
  %v50 = vld [vmem:[%s1 + $0x80] sm:$0xff]
  %v51 = vld [vmem:[%s1 + $0x88] sm:$0xff]
  %v52 = vld [vmem:[%s1 + $0x90] sm:$0xff]
  %v53 = vld [vmem:[%s1 + $0x98] sm:$0xff]
  %v54 = vld [vmem:[%s1 + $0xa0] sm:$0xff]
  %v55 = vld [vmem:[%s1 + $0xa8] sm:$0xff]
  %v56 = vld [vmem:[%s1 + $0xb0] sm:$0xff]
  %v57 = vld [vmem:[%s1 + $0xb8] sm:$0xff]
  %v58 = vld [vmem:[%s1 + $0xc0] sm:$0xff]
  %v59 = vld [vmem:[%s1 + $0xc8] sm:$0xff]
  %v60 = vld [vmem:[%s1 + $0xd0] sm:$0xff]
  %v61 = vld [vmem:[%s1 + $0xd8] sm:$0xff]
  %v62 = vld [vmem:[%s1 + $0xe0] sm:$0xff]
  %v63 = vld [vmem:[%s1 + $0xe8] sm:$0xff]
  %v64 = vld [vmem:[%s1 + $0xf0] sm:$0xff]
  %v65 = vld [vmem:[%s1 + $0xf8] sm:$0xff]
  %v66 = vld [vmem:[%s5] sm:$0xff]
  %v67 = vld [vmem:[%s5 + $0x8] sm:$0xff]
  %v68 = vld [vmem:[%s5 + $0x10] sm:$0xff]
  %v69 = vld [vmem:[%s5 + $0x18] sm:$0xff]
  %v70 = vld [vmem:[%s5 + $0x20] sm:$0xff]
  %v71 = vld [vmem:[%s5 + $0x28] sm:$0xff]
  %v72 = vld [vmem:[%s5 + $0x30] sm:$0xff]
  %v73 = vld [vmem:[%s5 + $0x38] sm:$0xff]
  %v74 = vld [vmem:[%s6] sm:$0xff]
  %v75 = vld [vmem:[%s6 + $0x8] sm:$0xff]
  %v76 = vld [vmem:[%s6 + $0x10] sm:$0xff]
  %v77 = vld [vmem:[%s6 + $0x18] sm:$0xff]
  %v78 = vld [vmem:[%s6 + $0x20] sm:$0xff]
  %v79 = vld [vmem:[%s6 + $0x28] sm:$0xff]
  %v80 = vld [vmem:[%s6 + $0x30] sm:$0xff]
  %v81 = vld [vmem:[%s6 + $0x38] sm:$0xff]
  %83 = vset.pattern.permute.xlu0 0
  %84 = vperm.xlu0 %83, %v74
  %v85 = vpop.permute.xlu0 %84
  %88 = vset.pattern.permute.xlu0 0
  %89 = vperm.xlu0 %88, %v75
  %v90 = vpop.permute.xlu0 %89
  %93 = vset.pattern.permute.xlu0 0
  %94 = vperm.xlu0 %93, %v76
  %v95 = vpop.permute.xlu0 %94
  %98 = vset.pattern.permute.xlu0 0
  %99 = vperm.xlu0 %98, %v77
  %v100 = vpop.permute.xlu0 %99
  %103 = vset.pattern.permute.xlu0 0
  %104 = vperm.xlu0 %103, %v78
  %v105 = vpop.permute.xlu0 %104
  %108 = vset.pattern.permute.xlu0 0
  %109 = vperm.xlu0 %108, %v79
  %v110 = vpop.permute.xlu0 %109
  %113 = vset.pattern.permute.xlu0 0
  %114 = vperm.xlu0 %113, %v80
  %v115 = vpop.permute.xlu0 %114
  %118 = vset.pattern.permute.xlu0 0
  %119 = vperm.xlu0 %118, %v81
  %v120 = vpop.permute.xlu0 %119
  %vm122 = vcmask 523264
  %v124 = vsel %vm122, %v66, 0
  %v127 = vsel %vm122, %v67, 0
  %v130 = vsel %vm122, %v68, 0
  %v133 = vsel %vm122, %v69, 0
  %v136 = vsel %vm122, %v70, 0
  %v139 = vsel %vm122, %v71, 0
  %v142 = vsel %vm122, %v72, 0
  %v145 = vsel %vm122, %v73, 0
  %147 = vmatpush.msra.mxu0 0.0
  %148 = vmatpush.msra.mxu0 0.0
  %149 = vmatpush.msra.mxu0 0.0
  %150 = vmatpush.msra.mxu0 0.0
  %151 = vmatpush.msra.mxu0 0.0
  %152 = vmatpush.msra.mxu0 0.0
  %153 = vmatpush.msra.mxu0 0.0
  %154 = vmatpush.msra.mxu0 0.0
  %155 = vmatpush.msra.mxu0 %v62
  %156 = vmatpush.msra.mxu0 %v58
  %157 = vmatpush.msra.mxu0 %v54
  %158 = vmatpush.msra.mxu0 %v50
  %159 = vmatpush.msra.mxu0 %v46
  %160 = vmatpush.msra.mxu0 %v42
  %161 = vmatpush.msra.mxu0 %v38
  %162 = vmatpush.msra.mxu0 %v34
  %163 = vmatmul.f32.gmra.mxu0 %v124
  %v164 = vpop.f32.mrf.mxu0
  %v165 = vadd.f32 %v85, %v164
  %166 = vmatmul.f32.gmra.mxu0 %v127
  %v167 = vpop.f32.mrf.mxu0
  %v168 = vadd.f32 %v90, %v167
  %169 = vmatmul.f32.gmra.mxu0 %v130
  %v170 = vpop.f32.mrf.mxu0
  %v171 = vadd.f32 %v95, %v170
  %172 = vmatmul.f32.gmra.mxu0 %v133
  %v173 = vpop.f32.mrf.mxu0
  %v174 = vadd.f32 %v100, %v173
  %175 = vmatmul.f32.gmra.mxu0 %v136
  %v176 = vpop.f32.mrf.mxu0
  %v177 = vadd.f32 %v105, %v176
  %178 = vmatmul.f32.gmra.mxu0 %v139
  %v179 = vpop.f32.mrf.mxu0
  %v180 = vadd.f32 %v110, %v179
  %181 = vmatmul.f32.gmra.mxu0 %v142
  %v182 = vpop.f32.mrf.mxu0
  %v183 = vadd.f32 %v115, %v182
  %184 = vmatmul.f32.gmra.mxu0 %v145
  %v185 = vpop.f32.mrf.mxu0
  %v186 = vadd.f32 %v120, %v185
  %187 = vdwg.mxu0
  %188 = vmatpush.msra.mxu0 0.0
  %189 = vmatpush.msra.mxu0 0.0
  %190 = vmatpush.msra.mxu0 0.0
  %191 = vmatpush.msra.mxu0 0.0
  %192 = vmatpush.msra.mxu0 0.0
  %193 = vmatpush.msra.mxu0 0.0
  %194 = vmatpush.msra.mxu0 0.0
  %195 = vmatpush.msra.mxu0 0.0
  %196 = vmatpush.msra.mxu0 %v63
  %197 = vmatpush.msra.mxu0 %v59
  %198 = vmatpush.msra.mxu0 %v55
  %199 = vmatpush.msra.mxu0 %v51
  %200 = vmatpush.msra.mxu0 %v47
  %201 = vmatpush.msra.mxu0 %v43
  %202 = vmatpush.msra.mxu0 %v39
  %203 = vmatpush.msra.mxu0 %v35
  %204 = vmatmul.f32.gmra.mxu0 %v124
  %v205 = vpop.f32.mrf.mxu0
  %v206 = vadd.f32 %v85, %v205
  %207 = vmatmul.f32.gmra.mxu0 %v127
  %v208 = vpop.f32.mrf.mxu0
  %v209 = vadd.f32 %v90, %v208
  %210 = vmatmul.f32.gmra.mxu0 %v130
  %v211 = vpop.f32.mrf.mxu0
  %v212 = vadd.f32 %v95, %v211
  %213 = vmatmul.f32.gmra.mxu0 %v133
  %v214 = vpop.f32.mrf.mxu0
  %v215 = vadd.f32 %v100, %v214
  %216 = vmatmul.f32.gmra.mxu0 %v136
  %v217 = vpop.f32.mrf.mxu0
  %v218 = vadd.f32 %v105, %v217
  %219 = vmatmul.f32.gmra.mxu0 %v139
  %v220 = vpop.f32.mrf.mxu0
  %v221 = vadd.f32 %v110, %v220
  %222 = vmatmul.f32.gmra.mxu0 %v142
  %v223 = vpop.f32.mrf.mxu0
  %v224 = vadd.f32 %v115, %v223
  %225 = vmatmul.f32.gmra.mxu0 %v145
  %v226 = vpop.f32.mrf.mxu0
  %v227 = vadd.f32 %v120, %v226
  %228 = vdwg.mxu0
  %229 = vmatpush.msra.mxu0 0.0
  %230 = vmatpush.msra.mxu0 0.0
  %231 = vmatpush.msra.mxu0 0.0
  %232 = vmatpush.msra.mxu0 0.0
  %233 = vmatpush.msra.mxu0 0.0
  %234 = vmatpush.msra.mxu0 0.0
  %235 = vmatpush.msra.mxu0 0.0
  %236 = vmatpush.msra.mxu0 0.0
  %237 = vmatpush.msra.mxu0 %v64
  %238 = vmatpush.msra.mxu0 %v60
  %239 = vmatpush.msra.mxu0 %v56
  %240 = vmatpush.msra.mxu0 %v52
  %241 = vmatpush.msra.mxu0 %v48
  %242 = vmatpush.msra.mxu0 %v44
  %243 = vmatpush.msra.mxu0 %v40
  %244 = vmatpush.msra.mxu0 %v36
  %245 = vmatmul.f32.gmra.mxu0 %v124
  %v246 = vpop.f32.mrf.mxu0
  %v247 = vadd.f32 %v85, %v246
  %248 = vmatmul.f32.gmra.mxu0 %v127
  %v249 = vpop.f32.mrf.mxu0
  %v250 = vadd.f32 %v90, %v249
  %251 = vmatmul.f32.gmra.mxu0 %v130
  %v252 = vpop.f32.mrf.mxu0
  %v253 = vadd.f32 %v95, %v252
  %254 = vmatmul.f32.gmra.mxu0 %v133
  %v255 = vpop.f32.mrf.mxu0
  %v256 = vadd.f32 %v100, %v255
  %257 = vmatmul.f32.gmra.mxu0 %v136
  %v258 = vpop.f32.mrf.mxu0
  %v259 = vadd.f32 %v105, %v258
  %260 = vmatmul.f32.gmra.mxu0 %v139
  %v261 = vpop.f32.mrf.mxu0
  %v262 = vadd.f32 %v110, %v261
  %263 = vmatmul.f32.gmra.mxu0 %v142
  %v264 = vpop.f32.mrf.mxu0
  %v265 = vadd.f32 %v115, %v264
  %266 = vmatmul.f32.gmra.mxu0 %v145
  %v267 = vpop.f32.mrf.mxu0
  %v268 = vadd.f32 %v120, %v267
  %269 = vdwg.mxu0
  %270 = vmatpush.msra.mxu0 0.0
  %271 = vmatpush.msra.mxu0 0.0
  %272 = vmatpush.msra.mxu0 0.0
  %273 = vmatpush.msra.mxu0 0.0
  %274 = vmatpush.msra.mxu0 0.0
  %275 = vmatpush.msra.mxu0 0.0
  %276 = vmatpush.msra.mxu0 0.0
  %277 = vmatpush.msra.mxu0 0.0
  %278 = vmatpush.msra.mxu0 %v65
  %279 = vmatpush.msra.mxu0 %v61
  %280 = vmatpush.msra.mxu0 %v57
  %281 = vmatpush.msra.mxu0 %v53
  %282 = vmatpush.msra.mxu0 %v49
  %283 = vmatpush.msra.mxu0 %v45
  %284 = vmatpush.msra.mxu0 %v41
  %285 = vmatpush.msra.mxu0 %v37
  %286 = vmatmul.f32.gmra.mxu0 %v124
  %v287 = vpop.f32.mrf.mxu0
  %v288 = vadd.f32 %v85, %v287
  %289 = vmatmul.f32.gmra.mxu0 %v127
  %v290 = vpop.f32.mrf.mxu0
  %v291 = vadd.f32 %v90, %v290
  %292 = vmatmul.f32.gmra.mxu0 %v130
  %v293 = vpop.f32.mrf.mxu0
  %v294 = vadd.f32 %v95, %v293
  %295 = vmatmul.f32.gmra.mxu0 %v133
  %v296 = vpop.f32.mrf.mxu0
  %v297 = vadd.f32 %v100, %v296
  %298 = vmatmul.f32.gmra.mxu0 %v136
  %v299 = vpop.f32.mrf.mxu0
  %v300 = vadd.f32 %v105, %v299
  %301 = vmatmul.f32.gmra.mxu0 %v139
  %v302 = vpop.f32.mrf.mxu0
  %v303 = vadd.f32 %v110, %v302
  %304 = vmatmul.f32.gmra.mxu0 %v142
  %v305 = vpop.f32.mrf.mxu0
  %v306 = vadd.f32 %v115, %v305
  %307 = vmatmul.f32.gmra.mxu0 %v145
  %v308 = vpop.f32.mrf.mxu0
  %v309 = vadd.f32 %v120, %v308
  %310 = vdwg.mxu0
  %v311 = vmax.f32 %v165, 0.0
  %v312 = vmax.f32 %v206, 0.0
  %v313 = vmax.f32 %v247, 0.0
  %v314 = vmax.f32 %v288, 0.0
  %v315 = vmax.f32 %v168, 0.0
  %v316 = vmax.f32 %v209, 0.0
  %v317 = vmax.f32 %v250, 0.0
  %v318 = vmax.f32 %v291, 0.0
  %v319 = vmax.f32 %v171, 0.0
  %v320 = vmax.f32 %v212, 0.0
  %v321 = vmax.f32 %v253, 0.0
  %v322 = vmax.f32 %v294, 0.0
  %v323 = vmax.f32 %v174, 0.0
  %v324 = vmax.f32 %v215, 0.0
  %v325 = vmax.f32 %v256, 0.0
  %v326 = vmax.f32 %v297, 0.0
  %v327 = vmax.f32 %v177, 0.0
  %v328 = vmax.f32 %v218, 0.0
  %v329 = vmax.f32 %v259, 0.0
  %v330 = vmax.f32 %v300, 0.0
  %v331 = vmax.f32 %v180, 0.0
  %v332 = vmax.f32 %v221, 0.0
  %v333 = vmax.f32 %v262, 0.0
  %v334 = vmax.f32 %v303, 0.0
  %v335 = vmax.f32 %v183, 0.0
  %v336 = vmax.f32 %v224, 0.0
  %v337 = vmax.f32 %v265, 0.0
  %v338 = vmax.f32 %v306, 0.0
  %v339 = vmax.f32 %v186, 0.0
  %v340 = vmax.f32 %v227, 0.0
  %v341 = vmax.f32 %v268, 0.0
  %v342 = vmax.f32 %v309, 0.0
  %v343 = vld [vmem:[%s7] sm:$0xff]
  %v344 = vld [vmem:[%s7 + $0x8] sm:$0xff]
  %v345 = vld [vmem:[%s8] sm:$0xff]
  %v346 = vld [vmem:[%s8 + $0x8] sm:$0xff]
  %348 = vset.pattern.permute.xlu0 0
  %349 = vperm.xlu0 %348, %v345
  %v350 = vpop.permute.xlu0 %349
  %353 = vset.pattern.permute.xlu0 0
  %354 = vperm.xlu0 %353, %v346
  %v355 = vpop.permute.xlu0 %354
  %vm357 = vcmask 261120
  %v359 = vsel %vm357, %v343, 0
  %v362 = vsel %vm357, %v344, 0
  %364 = vmatpush.msra.mxu0 0.0
  %365 = vmatpush.msra.mxu0 0.0
  %366 = vmatpush.msra.mxu0 0.0
  %367 = vmatpush.msra.mxu0 0.0
  %368 = vmatpush.msra.mxu0 0.0
  %369 = vmatpush.msra.mxu0 0.0
  %370 = vmatpush.msra.mxu0 0.0
  %371 = vmatpush.msra.mxu0 0.0
  %372 = vmatpush.msra.mxu0 0.0
  %373 = vmatpush.msra.mxu0 0.0
  %374 = vmatpush.msra.mxu0 0.0
  %375 = vmatpush.msra.mxu0 0.0
  %376 = vmatpush.msra.mxu0 %v323
  %377 = vmatpush.msra.mxu0 %v319
  %378 = vmatpush.msra.mxu0 %v315
  %379 = vmatpush.msra.mxu0 %v311
  %380 = vmatmul.f32.gmra.mxu0 %v359
  %v381 = vpop.f32.mrf.mxu0
  %v382 = vadd.f32 %v350, %v381
  %383 = vmatmul.f32.gmra.mxu0 %v362
  %v384 = vpop.f32.mrf.mxu0
  %v385 = vadd.f32 %v355, %v384
  %386 = vdwg.mxu0
  %387 = vmatpush.msra.mxu0 0.0
  %388 = vmatpush.msra.mxu0 0.0
  %389 = vmatpush.msra.mxu0 0.0
  %390 = vmatpush.msra.mxu0 0.0
  %391 = vmatpush.msra.mxu0 0.0
  %392 = vmatpush.msra.mxu0 0.0
  %393 = vmatpush.msra.mxu0 0.0
  %394 = vmatpush.msra.mxu0 0.0
  %395 = vmatpush.msra.mxu0 0.0
  %396 = vmatpush.msra.mxu0 0.0
  %397 = vmatpush.msra.mxu0 0.0
  %398 = vmatpush.msra.mxu0 0.0
  %399 = vmatpush.msra.mxu0 %v324
  %400 = vmatpush.msra.mxu0 %v320
  %401 = vmatpush.msra.mxu0 %v316
  %402 = vmatpush.msra.mxu0 %v312
  %403 = vmatmul.f32.gmra.mxu0 %v359
  %v404 = vpop.f32.mrf.mxu0
  %v405 = vadd.f32 %v350, %v404
  %406 = vmatmul.f32.gmra.mxu0 %v362
  %v407 = vpop.f32.mrf.mxu0
  %v408 = vadd.f32 %v355, %v407
  %409 = vdwg.mxu0
  %410 = vmatpush.msra.mxu0 0.0
  %411 = vmatpush.msra.mxu0 0.0
  %412 = vmatpush.msra.mxu0 0.0
  %413 = vmatpush.msra.mxu0 0.0
  %414 = vmatpush.msra.mxu0 0.0
  %415 = vmatpush.msra.mxu0 0.0
  %416 = vmatpush.msra.mxu0 0.0
  %417 = vmatpush.msra.mxu0 0.0
  %418 = vmatpush.msra.mxu0 0.0
  %419 = vmatpush.msra.mxu0 0.0
  %420 = vmatpush.msra.mxu0 0.0
  %421 = vmatpush.msra.mxu0 0.0
  %422 = vmatpush.msra.mxu0 %v325
  %423 = vmatpush.msra.mxu0 %v321
  %424 = vmatpush.msra.mxu0 %v317
  %425 = vmatpush.msra.mxu0 %v313
  %426 = vmatmul.f32.gmra.mxu0 %v359
  %v427 = vpop.f32.mrf.mxu0
  %v428 = vadd.f32 %v350, %v427
  %429 = vmatmul.f32.gmra.mxu0 %v362
  %v430 = vpop.f32.mrf.mxu0
  %v431 = vadd.f32 %v355, %v430
  %432 = vdwg.mxu0
  %433 = vmatpush.msra.mxu0 0.0
  %434 = vmatpush.msra.mxu0 0.0
  %435 = vmatpush.msra.mxu0 0.0
  %436 = vmatpush.msra.mxu0 0.0
  %437 = vmatpush.msra.mxu0 0.0
  %438 = vmatpush.msra.mxu0 0.0
  %439 = vmatpush.msra.mxu0 0.0
  %440 = vmatpush.msra.mxu0 0.0
  %441 = vmatpush.msra.mxu0 0.0
  %442 = vmatpush.msra.mxu0 0.0
  %443 = vmatpush.msra.mxu0 0.0
  %444 = vmatpush.msra.mxu0 0.0
  %445 = vmatpush.msra.mxu0 %v326
  %446 = vmatpush.msra.mxu0 %v322
  %447 = vmatpush.msra.mxu0 %v318
  %448 = vmatpush.msra.mxu0 %v314
  %449 = vmatmul.f32.gmra.mxu0 %v359
  %v450 = vpop.f32.mrf.mxu0
  %v451 = vadd.f32 %v350, %v450
  %452 = vmatmul.f32.gmra.mxu0 %v362
  %v453 = vpop.f32.mrf.mxu0
  %v454 = vadd.f32 %v355, %v453
  %455 = vdwg.mxu0
  %v456 = vadd.f32 %v385, 2.0
  %v457 = vadd.f32 %v408, 2.0
  %v458 = vadd.f32 %v431, 2.0
  %v459 = vadd.f32 %v454, 2.0
  %v460 = vsub.f32 0.0, %v456
  %v461 = vsub.f32 0.0, %v457
  %v462 = vsub.f32 0.0, %v458
  %v463 = vsub.f32 0.0, %v459
  %v464 = vmax.f32 %v460, 0.0
  %v465 = vmax.f32 %v461, 0.0
  %v466 = vmax.f32 %v462, 0.0
  %v467 = vmax.f32 %v463, 0.0
  %v468 = vand.u32 2147483647, %v456
  %v469 = vand.u32 2147483647, %v457
  %v470 = vand.u32 2147483647, %v458
  %v471 = vand.u32 2147483647, %v459
  %v472 = vsub.f32 0.0, %v468
  %v473 = vsub.f32 0.0, %v469
  %v474 = vsub.f32 0.0, %v470
  %v475 = vsub.f32 0.0, %v471
  %v476 = vmul.f32 %v472, 1.442695
  %v477 = vpow.pop %v476
  %v478 = vmul.f32 %v473, 1.442695
  %v479 = vpow.pop %v478
  %v480 = vmul.f32 %v474, 1.442695
  %v481 = vpow.pop %v480
  %v482 = vmul.f32 %v475, 1.442695
  %v483 = vpow.pop %v482
  %v484 = vadd.f32 %v477, 1.0
  %v485 = vadd.f32 %v479, 1.0
  %v486 = vadd.f32 %v481, 1.0
  %v487 = vadd.f32 %v483, 1.0
  %v488 = vlog2.pop %v484
  %v489 = vmul.f32 %v488, 0.6931472
  %v490 = vlog2.pop %v485
  %v491 = vmul.f32 %v490, 0.6931472
  %v492 = vlog2.pop %v486
  %v493 = vmul.f32 %v492, 0.6931472
  %v494 = vlog2.pop %v487
  %v495 = vmul.f32 %v494, 0.6931472
  %v496 = vadd.f32 %v464, %v489
  %v497 = vadd.f32 %v465, %v491
  %v498 = vadd.f32 %v466, %v493
  %v499 = vadd.f32 %v467, %v495
  %v500 = vsub.f32 0.0, %v496
  %v501 = vsub.f32 0.0, %v497
  %v502 = vsub.f32 0.0, %v498
  %v503 = vsub.f32 0.0, %v499
  %v504 = vmul.f32 %v500, 1.442695
  %v505 = vpow.pop %v504
  %v506 = vmul.f32 %v501, 1.442695
  %v507 = vpow.pop %v506
  %v508 = vmul.f32 %v502, 1.442695
  %v509 = vpow.pop %v508
  %v510 = vmul.f32 %v503, 1.442695
  %v511 = vpow.pop %v510
  %s512 = scalar_lea.vmem %s7, 16
  %v513 = vld [vmem:[%s512] sm:$0xff]
  %v514 = vld [vmem:[%s512 + $0x8] sm:$0xff]
  %s515 = scalar_lea.vmem %s8, 16
  %v516 = vld [vmem:[%s515] sm:$0xff]
  %v517 = vld [vmem:[%s515 + $0x8] sm:$0xff]
  %519 = vset.pattern.permute.xlu0 0
  %520 = vperm.xlu0 %519, %v516
  %v521 = vpop.permute.xlu0 %520
  %524 = vset.pattern.permute.xlu0 0
  %525 = vperm.xlu0 %524, %v517
  %v526 = vpop.permute.xlu0 %525
  %v529 = vsel %vm357, %v513, 0
  %v532 = vsel %vm357, %v514, 0
  %534 = vmatpush.msra.mxu0 0.0
  %535 = vmatpush.msra.mxu0 0.0
  %536 = vmatpush.msra.mxu0 0.0
  %537 = vmatpush.msra.mxu0 0.0
  %538 = vmatpush.msra.mxu0 0.0
  %539 = vmatpush.msra.mxu0 0.0
  %540 = vmatpush.msra.mxu0 0.0
  %541 = vmatpush.msra.mxu0 0.0
  %542 = vmatpush.msra.mxu0 0.0
  %543 = vmatpush.msra.mxu0 0.0
  %544 = vmatpush.msra.mxu0 0.0
  %545 = vmatpush.msra.mxu0 0.0
  %546 = vmatpush.msra.mxu0 %v339
  %547 = vmatpush.msra.mxu0 %v335
  %548 = vmatpush.msra.mxu0 %v331
  %549 = vmatpush.msra.mxu0 %v327
  %550 = vmatmul.f32.gmra.mxu0 %v529
  %v551 = vpop.f32.mrf.mxu0
  %v552 = vadd.f32 %v521, %v551
  %553 = vmatmul.f32.gmra.mxu0 %v532
  %v554 = vpop.f32.mrf.mxu0
  %v555 = vadd.f32 %v526, %v554
  %556 = vdwg.mxu0
  %557 = vmatpush.msra.mxu0 0.0
  %558 = vmatpush.msra.mxu0 0.0
  %559 = vmatpush.msra.mxu0 0.0
  %560 = vmatpush.msra.mxu0 0.0
  %561 = vmatpush.msra.mxu0 0.0
  %562 = vmatpush.msra.mxu0 0.0
  %563 = vmatpush.msra.mxu0 0.0
  %564 = vmatpush.msra.mxu0 0.0
  %565 = vmatpush.msra.mxu0 0.0
  %566 = vmatpush.msra.mxu0 0.0
  %567 = vmatpush.msra.mxu0 0.0
  %568 = vmatpush.msra.mxu0 0.0
  %569 = vmatpush.msra.mxu0 %v340
  %570 = vmatpush.msra.mxu0 %v336
  %571 = vmatpush.msra.mxu0 %v332
  %572 = vmatpush.msra.mxu0 %v328
  %573 = vmatmul.f32.gmra.mxu0 %v529
  %v574 = vpop.f32.mrf.mxu0
  %v575 = vadd.f32 %v521, %v574
  %576 = vmatmul.f32.gmra.mxu0 %v532
  %v577 = vpop.f32.mrf.mxu0
  %v578 = vadd.f32 %v526, %v577
  %579 = vdwg.mxu0
  %580 = vmatpush.msra.mxu0 0.0
  %581 = vmatpush.msra.mxu0 0.0
  %582 = vmatpush.msra.mxu0 0.0
  %583 = vmatpush.msra.mxu0 0.0
  %584 = vmatpush.msra.mxu0 0.0
  %585 = vmatpush.msra.mxu0 0.0
  %586 = vmatpush.msra.mxu0 0.0
  %587 = vmatpush.msra.mxu0 0.0
  %588 = vmatpush.msra.mxu0 0.0
  %589 = vmatpush.msra.mxu0 0.0
  %590 = vmatpush.msra.mxu0 0.0
  %591 = vmatpush.msra.mxu0 0.0
  %592 = vmatpush.msra.mxu0 %v341
  %593 = vmatpush.msra.mxu0 %v337
  %594 = vmatpush.msra.mxu0 %v333
  %595 = vmatpush.msra.mxu0 %v329
  %596 = vmatmul.f32.gmra.mxu0 %v529
  %v597 = vpop.f32.mrf.mxu0
  %v598 = vadd.f32 %v521, %v597
  %599 = vmatmul.f32.gmra.mxu0 %v532
  %v600 = vpop.f32.mrf.mxu0
  %v601 = vadd.f32 %v526, %v600
  %602 = vdwg.mxu0
  %603 = vmatpush.msra.mxu0 0.0
  %604 = vmatpush.msra.mxu0 0.0
  %605 = vmatpush.msra.mxu0 0.0
  %606 = vmatpush.msra.mxu0 0.0
  %607 = vmatpush.msra.mxu0 0.0
  %608 = vmatpush.msra.mxu0 0.0
  %609 = vmatpush.msra.mxu0 0.0
  %610 = vmatpush.msra.mxu0 0.0
  %611 = vmatpush.msra.mxu0 0.0
  %612 = vmatpush.msra.mxu0 0.0
  %613 = vmatpush.msra.mxu0 0.0
  %614 = vmatpush.msra.mxu0 0.0
  %615 = vmatpush.msra.mxu0 %v342
  %616 = vmatpush.msra.mxu0 %v338
  %617 = vmatpush.msra.mxu0 %v334
  %618 = vmatpush.msra.mxu0 %v330
  %619 = vmatmul.f32.gmra.mxu0 %v529
  %v620 = vpop.f32.mrf.mxu0
  %v621 = vadd.f32 %v521, %v620
  %622 = vmatmul.f32.gmra.mxu0 %v532
  %v623 = vpop.f32.mrf.mxu0
  %v624 = vadd.f32 %v526, %v623
  %625 = vdwg.mxu0
  %v626 = vadd.f32 %v555, 2.0
  %v627 = vadd.f32 %v578, 2.0
  %v628 = vadd.f32 %v601, 2.0
  %v629 = vadd.f32 %v624, 2.0
  %v630 = vsub.f32 0.0, %v626
  %v631 = vsub.f32 0.0, %v627
  %v632 = vsub.f32 0.0, %v628
  %v633 = vsub.f32 0.0, %v629
  %v634 = vmax.f32 %v630, 0.0
  %v635 = vmax.f32 %v631, 0.0
  %v636 = vmax.f32 %v632, 0.0
  %v637 = vmax.f32 %v633, 0.0
  %v638 = vand.u32 2147483647, %v626
  %v639 = vand.u32 2147483647, %v627
  %v640 = vand.u32 2147483647, %v628
  %v641 = vand.u32 2147483647, %v629
  %v642 = vsub.f32 0.0, %v638
  %v643 = vsub.f32 0.0, %v639
  %v644 = vsub.f32 0.0, %v640
  %v645 = vsub.f32 0.0, %v641
  %v646 = vmul.f32 %v642, 1.442695
  %v647 = vpow.pop %v646
  %v648 = vmul.f32 %v643, 1.442695
  %v649 = vpow.pop %v648
  %v650 = vmul.f32 %v644, 1.442695
  %v651 = vpow.pop %v650
  %v652 = vmul.f32 %v645, 1.442695
  %v653 = vpow.pop %v652
  %v654 = vadd.f32 %v647, 1.0
  %v655 = vadd.f32 %v649, 1.0
  %v656 = vadd.f32 %v651, 1.0
  %v657 = vadd.f32 %v653, 1.0
  %v658 = vlog2.pop %v654
  %v659 = vmul.f32 %v658, 0.6931472
  %v660 = vlog2.pop %v655
  %v661 = vmul.f32 %v660, 0.6931472
  %v662 = vlog2.pop %v656
  %v663 = vmul.f32 %v662, 0.6931472
  %v664 = vlog2.pop %v657
  %v665 = vmul.f32 %v664, 0.6931472
  %v666 = vadd.f32 %v634, %v659
  %v667 = vadd.f32 %v635, %v661
  %v668 = vadd.f32 %v636, %v663
  %v669 = vadd.f32 %v637, %v665
  %v670 = vsub.f32 0.0, %v666
  %v671 = vsub.f32 0.0, %v667
  %v672 = vsub.f32 0.0, %v668
  %v673 = vsub.f32 0.0, %v669
  %v674 = vmul.f32 %v670, 1.442695
  %v675 = vpow.pop %v674
  %v676 = vmul.f32 %v671, 1.442695
  %v677 = vpow.pop %v676
  %v678 = vmul.f32 %v672, 1.442695
  %v679 = vpow.pop %v678
  %v680 = vmul.f32 %v673, 1.442695
  %v681 = vpow.pop %v680
  %v682 = vld [vmem:[%s0] sm:$0xff]
  %v683 = vld [vmem:[%s0 + $0x8] sm:$0xff]
  %v684 = vld [vmem:[%s0 + $0x10] sm:$0xff]
  %v685 = vld [vmem:[%s0 + $0x18] sm:$0xff]
  %v686 = vld [vmem:[%s2] sm:$0xff]
  %688 = vset.pattern.permute.xlu0 0
  %689 = vperm.xlu0 %688, %v686
  %v690 = vpop.permute.xlu0 %689
  %v692 = vadd.f32 %v682, %v690
  %v693 = vadd.f32 %v683, %v690
  %v694 = vadd.f32 %v684, %v690
  %v695 = vadd.f32 %v685, %v690
  %v696 = vld [vmem:[%s3] sm:$0xff]
  %698 = vset.pattern.permute.xlu0 0
  %699 = vperm.xlu0 %698, %v696
  %v700 = vpop.permute.xlu0 %699
  %v702 = vmul.f32 %v692, %v700
  %v703 = vmul.f32 %v693, %v700
  %v704 = vmul.f32 %v694, %v700
  %v705 = vmul.f32 %v695, %v700
  %v706 = vld [vmem:[%s4] sm:$0xff]
  %vm707 = vcmask 64512
  %v709 = vsel %vm707, %v706, 0
  %711 = vmatpush.msra.mxu0 0.0
  %712 = vmatpush.msra.mxu0 0.0
  %713 = vmatpush.msra.mxu0 0.0
  %714 = vmatpush.msra.mxu0 0.0
  %715 = vmatpush.msra.mxu0 0.0
  %716 = vmatpush.msra.mxu0 0.0
  %717 = vmatpush.msra.mxu0 0.0
  %718 = vmatpush.msra.mxu0 0.0
  %719 = vmatpush.msra.mxu0 0.0
  %720 = vmatpush.msra.mxu0 0.0
  %721 = vmatpush.msra.mxu0 0.0
  %722 = vmatpush.msra.mxu0 0.0
  %723 = vmatpush.msra.mxu0 0.0
  %724 = vmatpush.msra.mxu0 0.0
  %725 = vmatpush.msra.mxu0 0.0
  %726 = vmatpush.msra.mxu0 %v702
  %727 = vmatmul.f32.gmra.mxu0 %v709
  %v728 = vpop.f32.mrf.mxu0
  %v729 = vadd.f32 %v382, %v728
  %730 = vdwg.mxu0
  %731 = vmatpush.msra.mxu0 0.0
  %732 = vmatpush.msra.mxu0 0.0
  %733 = vmatpush.msra.mxu0 0.0
  %734 = vmatpush.msra.mxu0 0.0
  %735 = vmatpush.msra.mxu0 0.0
  %736 = vmatpush.msra.mxu0 0.0
  %737 = vmatpush.msra.mxu0 0.0
  %738 = vmatpush.msra.mxu0 0.0
  %739 = vmatpush.msra.mxu0 0.0
  %740 = vmatpush.msra.mxu0 0.0
  %741 = vmatpush.msra.mxu0 0.0
  %742 = vmatpush.msra.mxu0 0.0
  %743 = vmatpush.msra.mxu0 0.0
  %744 = vmatpush.msra.mxu0 0.0
  %745 = vmatpush.msra.mxu0 0.0
  %746 = vmatpush.msra.mxu0 %v703
  %747 = vmatmul.f32.gmra.mxu0 %v709
  %v748 = vpop.f32.mrf.mxu0
  %v749 = vadd.f32 %v405, %v748
  %750 = vdwg.mxu0
  %751 = vmatpush.msra.mxu0 0.0
  %752 = vmatpush.msra.mxu0 0.0
  %753 = vmatpush.msra.mxu0 0.0
  %754 = vmatpush.msra.mxu0 0.0
  %755 = vmatpush.msra.mxu0 0.0
  %756 = vmatpush.msra.mxu0 0.0
  %757 = vmatpush.msra.mxu0 0.0
  %758 = vmatpush.msra.mxu0 0.0
  %759 = vmatpush.msra.mxu0 0.0
  %760 = vmatpush.msra.mxu0 0.0
  %761 = vmatpush.msra.mxu0 0.0
  %762 = vmatpush.msra.mxu0 0.0
  %763 = vmatpush.msra.mxu0 0.0
  %764 = vmatpush.msra.mxu0 0.0
  %765 = vmatpush.msra.mxu0 0.0
  %766 = vmatpush.msra.mxu0 %v704
  %767 = vmatmul.f32.gmra.mxu0 %v709
  %v768 = vpop.f32.mrf.mxu0
  %v769 = vadd.f32 %v428, %v768
  %770 = vdwg.mxu0
  %771 = vmatpush.msra.mxu0 0.0
  %772 = vmatpush.msra.mxu0 0.0
  %773 = vmatpush.msra.mxu0 0.0
  %774 = vmatpush.msra.mxu0 0.0
  %775 = vmatpush.msra.mxu0 0.0
  %776 = vmatpush.msra.mxu0 0.0
  %777 = vmatpush.msra.mxu0 0.0
  %778 = vmatpush.msra.mxu0 0.0
  %779 = vmatpush.msra.mxu0 0.0
  %780 = vmatpush.msra.mxu0 0.0
  %781 = vmatpush.msra.mxu0 0.0
  %782 = vmatpush.msra.mxu0 0.0
  %783 = vmatpush.msra.mxu0 0.0
  %784 = vmatpush.msra.mxu0 0.0
  %785 = vmatpush.msra.mxu0 0.0
  %786 = vmatpush.msra.mxu0 %v705
  %787 = vmatmul.f32.gmra.mxu0 %v709
  %v788 = vpop.f32.mrf.mxu0
  %v789 = vadd.f32 %v451, %v788
  %790 = vdwg.mxu0
  %v791 = vmul.f32 %v729, %v505
  %v792 = vmul.f32 %v749, %v507
  %v793 = vmul.f32 %v769, %v509
  %v794 = vmul.f32 %v789, %v511
  %s795 = scalar_lea.vmem %s2, 8
  %v796 = vld [vmem:[%s795] sm:$0xff]
  %798 = vset.pattern.permute.xlu0 0
  %799 = vperm.xlu0 %798, %v796
  %v800 = vpop.permute.xlu0 %799
  %v802 = vadd.f32 %v791, %v800
  %v803 = vadd.f32 %v792, %v800
  %v804 = vadd.f32 %v793, %v800
  %v805 = vadd.f32 %v794, %v800
  %s806 = scalar_lea.vmem %s3, 8
  %v807 = vld [vmem:[%s806] sm:$0xff]
  %809 = vset.pattern.permute.xlu0 0
  %810 = vperm.xlu0 %809, %v807
  %v811 = vpop.permute.xlu0 %810
  %v813 = vmul.f32 %v802, %v811
  %v814 = vmul.f32 %v803, %v811
  %v815 = vmul.f32 %v804, %v811
  %v816 = vmul.f32 %v805, %v811
  %s817 = scalar_lea.vmem %s4, 8
  %v818 = vld [vmem:[%s817] sm:$0xff]
  %v820 = vsel %vm707, %v818, 0
  %822 = vmatpush.msra.mxu0 0.0
  %823 = vmatpush.msra.mxu0 0.0
  %824 = vmatpush.msra.mxu0 0.0
  %825 = vmatpush.msra.mxu0 0.0
  %826 = vmatpush.msra.mxu0 0.0
  %827 = vmatpush.msra.mxu0 0.0
  %828 = vmatpush.msra.mxu0 0.0
  %829 = vmatpush.msra.mxu0 0.0
  %830 = vmatpush.msra.mxu0 0.0
  %831 = vmatpush.msra.mxu0 0.0
  %832 = vmatpush.msra.mxu0 0.0
  %833 = vmatpush.msra.mxu0 0.0
  %834 = vmatpush.msra.mxu0 0.0
  %835 = vmatpush.msra.mxu0 0.0
  %836 = vmatpush.msra.mxu0 0.0
  %837 = vmatpush.msra.mxu0 %v813
  %838 = vmatmul.f32.gmra.mxu0 %v820
  %v839 = vpop.f32.mrf.mxu0
  %v840 = vadd.f32 %v552, %v839
  %841 = vdwg.mxu0
  %842 = vmatpush.msra.mxu0 0.0
  %843 = vmatpush.msra.mxu0 0.0
  %844 = vmatpush.msra.mxu0 0.0
  %845 = vmatpush.msra.mxu0 0.0
  %846 = vmatpush.msra.mxu0 0.0
  %847 = vmatpush.msra.mxu0 0.0
  %848 = vmatpush.msra.mxu0 0.0
  %849 = vmatpush.msra.mxu0 0.0
  %850 = vmatpush.msra.mxu0 0.0
  %851 = vmatpush.msra.mxu0 0.0
  %852 = vmatpush.msra.mxu0 0.0
  %853 = vmatpush.msra.mxu0 0.0
  %854 = vmatpush.msra.mxu0 0.0
  %855 = vmatpush.msra.mxu0 0.0
  %856 = vmatpush.msra.mxu0 0.0
  %857 = vmatpush.msra.mxu0 %v814
  %858 = vmatmul.f32.gmra.mxu0 %v820
  %v859 = vpop.f32.mrf.mxu0
  %v860 = vadd.f32 %v575, %v859
  %861 = vdwg.mxu0
  %862 = vmatpush.msra.mxu0 0.0
  %863 = vmatpush.msra.mxu0 0.0
  %864 = vmatpush.msra.mxu0 0.0
  %865 = vmatpush.msra.mxu0 0.0
  %866 = vmatpush.msra.mxu0 0.0
  %867 = vmatpush.msra.mxu0 0.0
  %868 = vmatpush.msra.mxu0 0.0
  %869 = vmatpush.msra.mxu0 0.0
  %870 = vmatpush.msra.mxu0 0.0
  %871 = vmatpush.msra.mxu0 0.0
  %872 = vmatpush.msra.mxu0 0.0
  %873 = vmatpush.msra.mxu0 0.0
  %874 = vmatpush.msra.mxu0 0.0
  %875 = vmatpush.msra.mxu0 0.0
  %876 = vmatpush.msra.mxu0 0.0
  %877 = vmatpush.msra.mxu0 %v815
  %878 = vmatmul.f32.gmra.mxu0 %v820
  %v879 = vpop.f32.mrf.mxu0
  %v880 = vadd.f32 %v598, %v879
  %881 = vdwg.mxu0
  %882 = vmatpush.msra.mxu0 0.0
  %883 = vmatpush.msra.mxu0 0.0
  %884 = vmatpush.msra.mxu0 0.0
  %885 = vmatpush.msra.mxu0 0.0
  %886 = vmatpush.msra.mxu0 0.0
  %887 = vmatpush.msra.mxu0 0.0
  %888 = vmatpush.msra.mxu0 0.0
  %889 = vmatpush.msra.mxu0 0.0
  %890 = vmatpush.msra.mxu0 0.0
  %891 = vmatpush.msra.mxu0 0.0
  %892 = vmatpush.msra.mxu0 0.0
  %893 = vmatpush.msra.mxu0 0.0
  %894 = vmatpush.msra.mxu0 0.0
  %895 = vmatpush.msra.mxu0 0.0
  %896 = vmatpush.msra.mxu0 0.0
  %897 = vmatpush.msra.mxu0 %v816
  %898 = vmatmul.f32.gmra.mxu0 %v820
  %v899 = vpop.f32.mrf.mxu0
  %v900 = vadd.f32 %v621, %v899
  %901 = vdwg.mxu0
  %v902 = vmul.f32 %v840, %v675
  %v903 = vmul.f32 %v860, %v677
  %v904 = vmul.f32 %v880, %v679
  %v905 = vmul.f32 %v900, %v681
  %v906 = vadd.f32 %v500, %v670
  %v907 = vadd.f32 %v501, %v671
  %v908 = vadd.f32 %v502, %v672
  %v909 = vadd.f32 %v503, %v673
  %910 = vst [vmem:[%s9] sm:$0xff] %v902
  %911 = vst [vmem:[%s9 + $0x8] sm:$0xff] %v903
  %912 = vst [vmem:[%s9 + $0x10] sm:$0xff] %v904
  %913 = vst [vmem:[%s9 + $0x18] sm:$0xff] %v905
  %v914 = vrot.slane %v906, 4
  %v915 = vadd.f32 %v906, %v914
  %v916 = vrot.slane %v915, 2
  %v917 = vadd.f32 %v915, %v916
  %v918 = vrot.slane %v917, 1
  %v919 = vadd.f32 %v917, %v918
  %v920 = vrot.slane %v907, 4
  %v921 = vadd.f32 %v907, %v920
  %v922 = vrot.slane %v921, 2
  %v923 = vadd.f32 %v921, %v922
  %v924 = vrot.slane %v923, 1
  %v925 = vadd.f32 %v923, %v924
  %v926 = vrot.slane %v908, 4
  %v927 = vadd.f32 %v908, %v926
  %v928 = vrot.slane %v927, 2
  %v929 = vadd.f32 %v927, %v928
  %v930 = vrot.slane %v929, 1
  %v931 = vadd.f32 %v929, %v930
  %v932 = vrot.slane %v909, 4
  %v933 = vadd.f32 %v909, %v932
  %v934 = vrot.slane %v933, 2
  %v935 = vadd.f32 %v933, %v934
  %v936 = vrot.slane %v935, 1
  %v937 = vadd.f32 %v935, %v936
  %v942 = vrot.slane %v925, 7
  %v943 = vrot.slane %v931, 6
  %v944 = vrot.slane %v937, 5
  %vm945 = vcmask 1040384
  %v946 = vsel %vm945, %v919, %v942
  %vm947 = vcmask 1042434
  %v948 = vsel %vm947, %v943, %v944
  %vm949 = vcmask 1041408
  %v950 = vsel %vm949, %v946, %v948
  %v952 = vlaneseq
  %vm953 = vcmp.ge.s32.totalorder %v952, 0
  %vm954 = vcmp.lt.s32.totalorder %v952, 512
  %vm955 = vmand %vm953, %vm954
  %956 = vst.msk [vmem:[%s10] sm:$0xf] %vm955, %v950
  // Predicated region
  $region38: #{flow1dnet_encode.1} parent=0 // pred_check
    _
  $region39: #{flow1dnet_encode.1} parent=0 // pred_check_branch
    %958 = sbr.rel (0) target = $region41
  $region40: #{flow1dnet_encode.1} parent=0 // pred_region
    _
  $region41: #{flow1dnet_encode.1} parent=0 // pred_fallthru
    _
  // Predicated region
  $region42: #{flow1dnet_encode.1} parent=0 // pred_check
    _
  $region43: #{flow1dnet_encode.1} parent=0 // pred_check_branch
    %960 = sbr.rel (0) target = $region45
  $region44: #{flow1dnet_encode.1} parent=0 // pred_region
    _
  $region45: #{flow1dnet_encode.1} parent=0 // pred_fallthru
    _
  // Predicated region
  $region46: #{flow1dnet_encode.1} parent=0 // pred_check
    _
  $region47: #{flow1dnet_encode.1} parent=0 // pred_check_branch
    %962 = sbr.rel (0) target = $region49
  $region48: #{flow1dnet_encode.1} parent=0 // pred_region
    _
  $region49: #{flow1dnet_encode.1} parent=0 // pred_fallthru
    _
  // Predicated region
  $region50: #{flow1dnet_encode.1} parent=0 // pred_check
    _
  $region51: #{flow1dnet_encode.1} parent=0 // pred_check_branch
    %964 = sbr.rel (0) target = $region53
  $region52: #{flow1dnet_encode.1} parent=0 // pred_region
    _
  $region53: #{flow1dnet_encode.1} parent=0 // pred_fallthru
    _

</llo_original>
